<compile_context>
chip_gen: v5e
topology: v5e:2x2
jax: 0.10.0
libtpu: 0.0.40
codegen_flags: <defaults>
</compile_context>

<pallas_src>
import math
import functools

import jax
import jax.numpy as jnp
from jax.experimental import pallas as pl
from jax.experimental.pallas import tpu as pltpu

# ----------------------------- config (mirrors the PyTorch Config) ----------
N_EMBD = 64
N_HEADS = 4
N_LAYERS = 4
VOCAB_SIZE = 128     # config.vocab_size (not in the dataclass; chosen small, lane-dense)
BLOCK_SIZE = 16      # config.block_size (not in the dataclass; chosen small)
BATCH = 2
SEQ = 8              # T <= BLOCK_SIZE
LN_EPS = 1e-5


def _layernorm(x, g, b):
    # x: (BT, C), g/b: (1, C)
    mu = jnp.mean(x, axis=-1, keepdims=True)
    xc = x - mu
    var = jnp.mean(xc * xc, axis=-1, keepdims=True)
    inv = jax.lax.rsqrt(var + LN_EPS)
    return xc * inv * g + b


def _gelu_tanh(x):
    # GELU(approximate='tanh')
    c = 0.7978845608028654  # sqrt(2/pi)
    return 0.5 * x * (1.0 + jnp.tanh(c * (x + 0.044715 * x * x * x)))


# ----------------------------- fused GPT kernel ------------------------------
def gpt_kernel(x_ref, ln1g_ref, ln1b_ref, wq_ref, wk_ref, wv_ref, wpo_ref,
               ln2g_ref, ln2b_ref, wfc_ref, wmp_ref, lnfg_ref, lnfb_ref,
               wte_t_ref, o_ref, x_sc, *, n_heads, batch, seq):
    l = pl.program_id(0)

    # Load the embeddings into the resident VMEM accumulator once.
    @pl.when(l == 0)
    def _():
        x_sc[...] = x_ref[...]

    x = x_sc[...]                                   # (BT, C) f32 residual stream
    BT, C = x.shape
    dh = C // n_heads
    scale = 1.0 / math.sqrt(dh)
    bf16 = jnp.bfloat16

    # ---------------- attention branch ----------------
    h = _layernorm(x, ln1g_ref[0], ln1b_ref[0]).astype(bf16)      # (BT, C)

    row = jax.lax.broadcasted_iota(jnp.int32, (seq, seq), 0)
    col = jax.lax.broadcasted_iota(jnp.int32, (seq, seq), 1)
    causal = (row >= col)[None, :, :]                             # (1, T, T)

    attn_out = jnp.zeros((BT, C), jnp.float32)
    for hd in range(n_heads):                                     # static unroll
        qh = jnp.dot(h, wq_ref[0, hd], preferred_element_type=jnp.float32)  # (BT, dh)
        kh = jnp.dot(h, wk_ref[0, hd], preferred_element_type=jnp.float32)
        vh = jnp.dot(h, wv_ref[0, hd], preferred_element_type=jnp.float32)
        q3 = qh.reshape(batch, seq, dh)
        k3 = kh.reshape(batch, seq, dh)
        v3 = vh.reshape(batch, seq, dh)

        s = jnp.einsum('bqd,bkd->bqk', q3, k3,
                       preferred_element_type=jnp.float32) * scale           # (B, T, T)
        s = jnp.where(causal, s, -1e30)
        m = jnp.max(s, axis=-1, keepdims=True)
        p = jnp.exp(s - m)
        p = p / jnp.sum(p, axis=-1, keepdims=True)
        o3 = jnp.einsum('bqk,bkd->bqd', p, v3,
                        preferred_element_type=jnp.float32)                  # (B, T, dh)

        oh = o3.reshape(BT, dh).astype(bf16)
        # per-head accumulation through the output projection (no concat)
        attn_out = attn_out + jnp.dot(oh, wpo_ref[0, hd],
                                      preferred_element_type=jnp.float32)
    x = x + attn_out

    # ---------------- MLP branch ----------------
    h2 = _layernorm(x, ln2g_ref[0], ln2b_ref[0]).astype(bf16)
    f = jnp.dot(h2, wfc_ref[0], preferred_element_type=jnp.float32)          # (BT, 4C)
    g = _gelu_tanh(f).astype(bf16)
    x = x + jnp.dot(g, wmp_ref[0], preferred_element_type=jnp.float32)

    x_sc[...] = x

    # ---------------- final LN + tied lm_head on the last layer step ---------
    @pl.when(l == pl.num_programs(0) - 1)
    def _():
        hf = _layernorm(x, lnfg_ref[...], lnfb_ref[...]).astype(bf16)
        o_ref[...] = jnp.dot(hf, wte_t_ref[...],
                             preferred_element_type=jnp.float32)             # (BT, V)


def run_gpt(x2d, params, batch, seq):
    BT, C = x2d.shape
    L, H = N_LAYERS, N_HEADS
    V = VOCAB_SIZE

    def const_spec(shape):
        n = len(shape)
        return pl.BlockSpec(shape, lambda l, n=n: (0,) * n)

    def per_layer_spec(arr):
        shape = arr.shape
        n = len(shape) - 1
        return pl.BlockSpec((1,) + shape[1:], lambda l, n=n: (l,) + (0,) * n)

    in_specs = [
        const_spec((BT, C)),                                  # x (embeddings)
        per_layer_spec(params["ln1_g"]), per_layer_spec(params["ln1_b"]),
        per_layer_spec(params["w_q"]), per_layer_spec(params["w_k"]),
        per_layer_spec(params["w_v"]), per_layer_spec(params["w_po"]),
        per_layer_spec(params["ln2_g"]), per_layer_spec(params["ln2_b"]),
        per_layer_spec(params["w_fc"]), per_layer_spec(params["w_mp"]),
        const_spec(params["ln_f_g"].shape), const_spec(params["ln_f_b"].shape),
        const_spec(params["wte_t"].shape),
    ]

    kernel = functools.partial(gpt_kernel, n_heads=H, batch=batch, seq=seq)

    return pl.pallas_call(
        kernel,
        out_shape=jax.ShapeDtypeStruct((BT, V), jnp.float32),
        grid=(L,),
        in_specs=in_specs,
        out_specs=pl.BlockSpec((BT, V), lambda l: (0, 0)),
        scratch_shapes=[pltpu.VMEM((BT, C), jnp.float32)],
        compiler_params=pltpu.CompilerParams(dimension_semantics=("arbitrary",)),
    )(x2d,
      params["ln1_g"], params["ln1_b"],
      params["w_q"], params["w_k"], params["w_v"], params["w_po"],
      params["ln2_g"], params["ln2_b"],
      params["w_fc"], params["w_mp"],
      params["ln_f_g"], params["ln_f_b"], params["wte_t"])


# ----------------------------- parameter init --------------------------------
def init_params(key):
    std = 0.02
    std_res = 0.02 * 2.0 * (N_LAYERS ** -0.5)   # res_flag scaling from _init_weight
    C, H, V, L = N_EMBD, N_HEADS, VOCAB_SIZE, N_LAYERS
    dh = C // H
    keys = jax.random.split(key, 2 + 4 * L)
    k_it = iter(keys)

    wte = std * jax.random.normal(next(k_it), (V, C), jnp.float32)
    wpe = std * jax.random.normal(next(k_it), (BLOCK_SIZE, C), jnp.float32)

    ln1_g, ln1_b, ln2_g, ln2_b = [], [], [], []
    w_q, w_k, w_v, w_po, w_fc, w_mp = [], [], [], [], [], []
    for _ in range(L):
        wqkv = std * jax.random.normal(next(k_it), (C, 3 * C), jnp.float32)   # (in, out)
        wproj = std_res * jax.random.normal(next(k_it), (C, C), jnp.float32)
        wfc = std * jax.random.normal(next(k_it), (C, 4 * C), jnp.float32)
        wmp = std_res * jax.random.normal(next(k_it), (4 * C, C), jnp.float32)

        # pre-split q/k/v per head: (C, C) -> (H, C, dh)
        w_q.append(wqkv[:, 0 * C:1 * C].reshape(C, H, dh).transpose(1, 0, 2))
        w_k.append(wqkv[:, 1 * C:2 * C].reshape(C, H, dh).transpose(1, 0, 2))
        w_v.append(wqkv[:, 2 * C:3 * C].reshape(C, H, dh).transpose(1, 0, 2))
        # attention out-projection split by head rows: (C, C) -> (H, dh, C)
        w_po.append(wproj.reshape(H, dh, C))
        w_fc.append(wfc)
        w_mp.append(wmp)
        ln1_g.append(jnp.ones((1, C), jnp.float32)); ln1_b.append(jnp.zeros((1, C), jnp.float32))
        ln2_g.append(jnp.ones((1, C), jnp.float32)); ln2_b.append(jnp.zeros((1, C), jnp.float32))

    bf = jnp.bfloat16
    return dict(
        wte=wte,                               # (V, C) f32 for embedding gather
        wpe=wpe,                               # (BLOCK_SIZE, C) f32
        wte_t=wte.T.astype(bf),                # hoisted tied lm_head weight (C, V) bf16
        ln1_g=jnp.stack(ln1_g), ln1_b=jnp.stack(ln1_b),        # (L, 1, C) f32
        ln2_g=jnp.stack(ln2_g), ln2_b=jnp.stack(ln2_b),
        w_q=jnp.stack(w_q).astype(bf),         # (L, H, C, dh) bf16
        w_k=jnp.stack(w_k).astype(bf),
        w_v=jnp.stack(w_v).astype(bf),
        w_po=jnp.stack(w_po).astype(bf),       # (L, H, dh, C) bf16
        w_fc=jnp.stack(w_fc).astype(bf),       # (L, C, 4C) bf16
        w_mp=jnp.stack(w_mp).astype(bf),       # (L, 4C, C) bf16
        ln_f_g=jnp.ones((1, C), jnp.float32),
        ln_f_b=jnp.zeros((1, C), jnp.float32),
    )


# ----------------------------- full forward -----------------------------------
def gpt_forward(idx, params):
    # idx: (B, T) int32 token ids. Returns logits (B, T, VOCAB_SIZE).
    B, T = idx.shape
    C = N_EMBD
    tok_emb = jnp.take(params["wte"], idx, axis=0)           # (B, T, C)
    pos_emb = params["wpe"][:T]                              # (T, C)
    x = (tok_emb + pos_emb[None, :, :]).reshape(B * T, C)    # fold batch into rows
    logits = run_gpt(x, params, B, T)                        # (B*T, V)
    # TODO(synk): cross-entropy loss path (targets != None, ignore_index) not implemented.
    return logits.reshape(B, T, VOCAB_SIZE)


if __name__ == "__main__":
    key = jax.random.PRNGKey(0)
    pkey, dkey = jax.random.split(key)
    params = init_params(pkey)
    idx = jax.random.randint(dkey, (BATCH, SEQ), 0, VOCAB_SIZE, dtype=jnp.int32)

    logits = gpt_forward(idx, params)
    jax.block_until_ready(logits)
    assert logits.shape == (BATCH, SEQ, VOCAB_SIZE)
    assert bool(jnp.all(jnp.isfinite(logits)))
    print("KERNEL_OK")
</pallas_src>

<mosaic_0001>
module attributes {stable_mosaic.version = 11 : i64} {
  func.func @gpt_kernel(%arg0: i32, %arg1: memref<16x64xf32, #tpu.memory_space<vmem>>, %arg2: memref<1x1x64xf32, #tpu.memory_space<vmem>>, %arg3: memref<1x1x64xf32, #tpu.memory_space<vmem>>, %arg4: memref<1x4x64x16xbf16, #tpu.memory_space<vmem>>, %arg5: memref<1x4x64x16xbf16, #tpu.memory_space<vmem>>, %arg6: memref<1x4x64x16xbf16, #tpu.memory_space<vmem>>, %arg7: memref<1x4x16x64xbf16, #tpu.memory_space<vmem>>, %arg8: memref<1x1x64xf32, #tpu.memory_space<vmem>>, %arg9: memref<1x1x64xf32, #tpu.memory_space<vmem>>, %arg10: memref<1x64x256xbf16, #tpu.memory_space<vmem>>, %arg11: memref<1x256x64xbf16, #tpu.memory_space<vmem>>, %arg12: memref<1x64xf32, #tpu.memory_space<vmem>>, %arg13: memref<1x64xf32, #tpu.memory_space<vmem>>, %arg14: memref<64x128xbf16, #tpu.memory_space<vmem>>, %arg15: memref<16x128xf32, #tpu.memory_space<vmem>>, %arg16: memref<16x64xf32, #tpu.memory_space<vmem>>) attributes {dimension_semantics = [#tpu.dimension_semantics<arbitrary>], iteration_bounds = array<i64: 4>, scalar_prefetch = 0 : i64, scratch_operands = 1 : i64, tpu.core_type = #tpu.core_type<tc>, window_params = [{pipeline_mode = #tpu.pipeline_mode<synchronous>, transform_indices = @transform_0, window_bounds = array<i64: 16, 64>}, {transform_indices = @transform_1, window_bounds = array<i64: 1, 1, 64>}, {transform_indices = @transform_2, window_bounds = array<i64: 1, 1, 64>}, {transform_indices = @transform_3, window_bounds = array<i64: 1, 4, 64, 16>}, {transform_indices = @transform_4, window_bounds = array<i64: 1, 4, 64, 16>}, {transform_indices = @transform_5, window_bounds = array<i64: 1, 4, 64, 16>}, {transform_indices = @transform_6, window_bounds = array<i64: 1, 4, 16, 64>}, {transform_indices = @transform_7, window_bounds = array<i64: 1, 1, 64>}, {transform_indices = @transform_8, window_bounds = array<i64: 1, 1, 64>}, {transform_indices = @transform_9, window_bounds = array<i64: 1, 64, 256>}, {transform_indices = @transform_10, window_bounds = array<i64: 1, 256, 64>}, {pipeline_mode = #tpu.pipeline_mode<synchronous>, transform_indices = @transform_11, window_bounds = array<i64: 1, 64>}, {pipeline_mode = #tpu.pipeline_mode<synchronous>, transform_indices = @transform_12, window_bounds = array<i64: 1, 64>}, {pipeline_mode = #tpu.pipeline_mode<synchronous>, transform_indices = @transform_13, window_bounds = array<i64: 64, 128>}, {pipeline_mode = #tpu.pipeline_mode<synchronous>, transform_indices = @transform_14, window_bounds = array<i64: 16, 128>}]} {
    %c0_i32 = arith.constant 0 : i32
    %0 = arith.cmpi eq, %arg0, %c0_i32 : i32
    %1 = arith.extui %0 : i1 to i32
    %c0_i32_0 = arith.constant 0 : i32
    %2 = arith.cmpi ne, %1, %c0_i32_0 : i32
    scf.if %2 {
      %c0_140 = arith.constant 0 : index
      %c0_141 = arith.constant 0 : index
      %225 = vector.load %arg1[%c0_140, %c0_141] : memref<16x64xf32, #tpu.memory_space<vmem>>, vector<16x64xf32>
      %c0_142 = arith.constant 0 : index
      %c0_143 = arith.constant 0 : index
      %226 = vector.load %arg16[%c0_142, %c0_143] : memref<16x64xf32, #tpu.memory_space<vmem>>, vector<16x64xf32>
      tpu.vector_store %arg16[%c0_142, %c0_143], %225 {strides = array<i32>} : memref<16x64xf32, #tpu.memory_space<vmem>>, vector<16x64xf32>,
    } else {
    }
    %c0 = arith.constant 0 : index
    %c0_1 = arith.constant 0 : index
    %3 = vector.load %arg16[%c0, %c0_1] : memref<16x64xf32, #tpu.memory_space<vmem>>, vector<16x64xf32>
    %c0_2 = arith.constant 0 : index
    %c0_3 = arith.constant 0 : index
    %c0_4 = arith.constant 0 : index
    %4 = vector.load %arg2[%c0_2, %c0_3, %c0_4] : memref<1x1x64xf32, #tpu.memory_space<vmem>>, vector<1x1x64xf32>
    %5 = vector.shape_cast %4 : vector<1x1x64xf32> to vector<1x64xf32>
    %c0_5 = arith.constant 0 : index
    %c0_6 = arith.constant 0 : index
    %c0_7 = arith.constant 0 : index
    %6 = vector.load %arg3[%c0_5, %c0_6, %c0_7] : memref<1x1x64xf32, #tpu.memory_space<vmem>>, vector<1x1x64xf32>
    %7 = vector.shape_cast %6 : vector<1x1x64xf32> to vector<1x64xf32>
    %cst = arith.constant dense<0.000000e+00> : vector<16xf32>
    %8 = vector.multi_reduction <add>, %3, %cst [1] : vector<16x64xf32> to vector<16xf32>
    %9 = vector.shape_cast %8 : vector<16xf32> to vector<16x1xf32>
    %cst_8 = arith.constant 6.400000e+01 : f32
    %10 = vector.broadcast %cst_8 : f32 to vector<16x1xf32>
    %11 = arith.divf %9, %10 : vector<16x1xf32>
    %12 = vector.broadcast %11 : vector<16x1xf32> to vector<16x64xf32>
    %13 = arith.subf %3, %12 : vector<16x64xf32>
    %14 = arith.mulf %13, %13 : vector<16x64xf32>
    %cst_9 = arith.constant dense<0.000000e+00> : vector<16xf32>
    %15 = vector.multi_reduction <add>, %14, %cst_9 [1] : vector<16x64xf32> to vector<16xf32>
    %16 = vector.shape_cast %15 : vector<16xf32> to vector<16x1xf32>
    %cst_10 = arith.constant 6.400000e+01 : f32
    %17 = vector.broadcast %cst_10 : f32 to vector<16x1xf32>
    %18 = arith.divf %16, %17 : vector<16x1xf32>
    %cst_11 = arith.constant 9.99999974E-6 : f32
    %19 = vector.broadcast %cst_11 : f32 to vector<16x1xf32>
    %20 = arith.addf %18, %19 : vector<16x1xf32>
    %21 = math.rsqrt %20 : vector<16x1xf32>
    %22 = vector.broadcast %21 : vector<16x1xf32> to vector<16x64xf32>
    %23 = arith.mulf %13, %22 : vector<16x64xf32>
    %24 = vector.broadcast %5 : vector<1x64xf32> to vector<16x64xf32>
    %25 = arith.mulf %23, %24 : vector<16x64xf32>
    %26 = vector.broadcast %7 : vector<1x64xf32> to vector<16x64xf32>
    %27 = arith.addf %25, %26 : vector<16x64xf32>
    %28 = arith.truncf %27 : vector<16x64xf32> to vector<16x64xbf16>
    %29 = tpu.iota {dimensions = array<i32: 0>} : vector<8x8xi32>
    %30 = tpu.iota {dimensions = array<i32: 1>} : vector<8x8xi32>
    %31 = arith.cmpi sge, %29, %30 : vector<8x8xi32>
    %32 = vector.shape_cast %31 : vector<8x8xi1> to vector<1x8x8xi1>
    %cst_12 = arith.constant 0.000000e+00 : f32
    %33 = vector.broadcast %cst_12 : f32 to vector<16x64xf32>
    %c0_13 = arith.constant 0 : index
    %c0_14 = arith.constant 0 : index
    %c0_15 = arith.constant 0 : index
    %c0_16 = arith.constant 0 : index
    %34 = vector.load %arg4[%c0_13, %c0_14, %c0_15, %c0_16] : memref<1x4x64x16xbf16, #tpu.memory_space<vmem>>, vector<1x1x64x16xbf16>
    %35 = vector.shape_cast %34 : vector<1x1x64x16xbf16> to vector<64x16xbf16>
    %cst_17 = arith.constant dense<0.000000e+00> : vector<16x16xf32>
    %36 = tpu.matmul %28, %35, %cst_17 {dimension_numbers = #tpu.dot_dimension_numbers<[1], [0], [0], [1], [0, 0, 1, 1], [], []>} : vector<16x64xbf16>, vector<64x16xbf16>, vector<16x16xf32> -> vector<16x16xf32>
    %c0_18 = arith.constant 0 : index
    %c0_19 = arith.constant 0 : index
    %c0_20 = arith.constant 0 : index
    %c0_21 = arith.constant 0 : index
    %37 = vector.load %arg5[%c0_18, %c0_19, %c0_20, %c0_21] : memref<1x4x64x16xbf16, #tpu.memory_space<vmem>>, vector<1x1x64x16xbf16>
    %38 = vector.shape_cast %37 : vector<1x1x64x16xbf16> to vector<64x16xbf16>
    %cst_22 = arith.constant dense<0.000000e+00> : vector<16x16xf32>
    %39 = tpu.matmul %28, %38, %cst_22 {dimension_numbers = #tpu.dot_dimension_numbers<[1], [0], [0], [1], [0, 0, 1, 1], [], []>} : vector<16x64xbf16>, vector<64x16xbf16>, vector<16x16xf32> -> vector<16x16xf32>
    %c0_23 = arith.constant 0 : index
    %c0_24 = arith.constant 0 : index
    %c0_25 = arith.constant 0 : index
    %c0_26 = arith.constant 0 : index
    %40 = vector.load %arg6[%c0_23, %c0_24, %c0_25, %c0_26] : memref<1x4x64x16xbf16, #tpu.memory_space<vmem>>, vector<1x1x64x16xbf16>
    %41 = vector.shape_cast %40 : vector<1x1x64x16xbf16> to vector<64x16xbf16>
    %cst_27 = arith.constant dense<0.000000e+00> : vector<16x16xf32>
    %42 = tpu.matmul %28, %41, %cst_27 {dimension_numbers = #tpu.dot_dimension_numbers<[1], [0], [0], [1], [0, 0, 1, 1], [], []>} : vector<16x64xbf16>, vector<64x16xbf16>, vector<16x16xf32> -> vector<16x16xf32>
    %43 = vector.shape_cast %36 : vector<16x16xf32> to vector<2x8x16xf32>
    %44 = vector.shape_cast %39 : vector<16x16xf32> to vector<2x8x16xf32>
    %45 = vector.shape_cast %42 : vector<16x16xf32> to vector<2x8x16xf32>
    "tpu.trace_start"() <{level = 10 : i32, message = "bqd,bkd->bqk"}> : () -> ()
    %cst_28 = arith.constant dense<0.000000e+00> : vector<2x8x8xf32>
    %46 = tpu.matmul %43, %44, %cst_28 {dimension_numbers = #tpu.dot_dimension_numbers<[2], [2], [1], [1], [0, 0, 0, 1, 1, 1], [0], [0]>} : vector<2x8x16xf32>, vector<2x8x16xf32>, vector<2x8x8xf32> -> vector<2x8x8xf32>
    "tpu.trace_stop"() : () -> ()
    %cst_29 = arith.constant 2.500000e-01 : f32
    %47 = vector.broadcast %cst_29 : f32 to vector<2x8x8xf32>
    %48 = arith.mulf %46, %47 : vector<2x8x8xf32>
    %cst_30 = arith.constant -1.000000e+30 : f32
    %49 = vector.shape_cast %32 : vector<1x8x8xi1> to vector<1x8x8xi1>
    %50 = vector.broadcast %49 : vector<1x8x8xi1> to vector<2x8x8xi1>
    %51 = vector.broadcast %cst_30 : f32 to vector<2x8x8xf32>
    %52 = arith.select %50, %48, %51 : vector<2x8x8xi1>, vector<2x8x8xf32>
    %cst_31 = arith.constant dense<0xFF800000> : vector<2x8xf32>
    %53 = vector.multi_reduction <maximumf>, %52, %cst_31 [2] : vector<2x8x8xf32> to vector<2x8xf32>
    %54 = vector.shape_cast %53 : vector<2x8xf32> to vector<2x8x1xf32>
    %55 = vector.broadcast %54 : vector<2x8x1xf32> to vector<2x8x8xf32>
    %56 = arith.subf %52, %55 : vector<2x8x8xf32>
    %57 = math.exp %56 : vector<2x8x8xf32>
    %cst_32 = arith.constant dense<0.000000e+00> : vector<2x8xf32>
    %58 = vector.multi_reduction <add>, %57, %cst_32 [2] : vector<2x8x8xf32> to vector<2x8xf32>
    %59 = vector.shape_cast %58 : vector<2x8xf32> to vector<2x8x1xf32>
    %60 = vector.broadcast %59 : vector<2x8x1xf32> to vector<2x8x8xf32>
    %61 = arith.divf %57, %60 : vector<2x8x8xf32>
    "tpu.trace_start"() <{level = 10 : i32, message = "bqk,bkd->bqd"}> : () -> ()
    %cst_33 = arith.constant dense<0.000000e+00> : vector<2x8x16xf32>
    %62 = tpu.matmul %61, %45, %cst_33 {dimension_numbers = #tpu.dot_dimension_numbers<[2], [1], [1], [2], [0, 0, 0, 1, 1, 2], [0], [0]>} : vector<2x8x8xf32>, vector<2x8x16xf32>, vector<2x8x16xf32> -> vector<2x8x16xf32>
    "tpu.trace_stop"() : () -> ()
    %63 = vector.shape_cast %62 : vector<2x8x16xf32> to vector<16x16xf32>
    %64 = arith.truncf %63 : vector<16x16xf32> to vector<16x16xbf16>
    %c0_34 = arith.constant 0 : index
    %c0_35 = arith.constant 0 : index
    %c0_36 = arith.constant 0 : index
    %c0_37 = arith.constant 0 : index
    %65 = vector.load %arg7[%c0_34, %c0_35, %c0_36, %c0_37] : memref<1x4x16x64xbf16, #tpu.memory_space<vmem>>, vector<1x1x16x64xbf16>
    %66 = vector.shape_cast %65 : vector<1x1x16x64xbf16> to vector<16x64xbf16>
    %cst_38 = arith.constant dense<0.000000e+00> : vector<16x64xf32>
    %67 = tpu.matmul %64, %66, %cst_38 {dimension_numbers = #tpu.dot_dimension_numbers<[1], [0], [0], [1], [0, 0, 1, 1], [], []>} : vector<16x16xbf16>, vector<16x64xbf16>, vector<16x64xf32> -> vector<16x64xf32>
    %68 = arith.addf %33, %67 : vector<16x64xf32>
    %c0_39 = arith.constant 0 : index
    %c1 = arith.constant 1 : index
    %c0_40 = arith.constant 0 : index
    %c0_41 = arith.constant 0 : index
    %69 = vector.load %arg4[%c0_39, %c1, %c0_40, %c0_41] : memref<1x4x64x16xbf16, #tpu.memory_space<vmem>>, vector<1x1x64x16xbf16>
    %70 = vector.shape_cast %69 : vector<1x1x64x16xbf16> to vector<64x16xbf16>
    %cst_42 = arith.constant dense<0.000000e+00> : vector<16x16xf32>
    %71 = tpu.matmul %28, %70, %cst_42 {dimension_numbers = #tpu.dot_dimension_numbers<[1], [0], [0], [1], [0, 0, 1, 1], [], []>} : vector<16x64xbf16>, vector<64x16xbf16>, vector<16x16xf32> -> vector<16x16xf32>
    %c0_43 = arith.constant 0 : index
    %c1_44 = arith.constant 1 : index
    %c0_45 = arith.constant 0 : index
    %c0_46 = arith.constant 0 : index
    %72 = vector.load %arg5[%c0_43, %c1_44, %c0_45, %c0_46] : memref<1x4x64x16xbf16, #tpu.memory_space<vmem>>, vector<1x1x64x16xbf16>
    %73 = vector.shape_cast %72 : vector<1x1x64x16xbf16> to vector<64x16xbf16>
    %cst_47 = arith.constant dense<0.000000e+00> : vector<16x16xf32>
    %74 = tpu.matmul %28, %73, %cst_47 {dimension_numbers = #tpu.dot_dimension_numbers<[1], [0], [0], [1], [0, 0, 1, 1], [], []>} : vector<16x64xbf16>, vector<64x16xbf16>, vector<16x16xf32> -> vector<16x16xf32>
    %c0_48 = arith.constant 0 : index
    %c1_49 = arith.constant 1 : index
    %c0_50 = arith.constant 0 : index
    %c0_51 = arith.constant 0 : index
    %75 = vector.load %arg6[%c0_48, %c1_49, %c0_50, %c0_51] : memref<1x4x64x16xbf16, #tpu.memory_space<vmem>>, vector<1x1x64x16xbf16>
    %76 = vector.shape_cast %75 : vector<1x1x64x16xbf16> to vector<64x16xbf16>
    %cst_52 = arith.constant dense<0.000000e+00> : vector<16x16xf32>
    %77 = tpu.matmul %28, %76, %cst_52 {dimension_numbers = #tpu.dot_dimension_numbers<[1], [0], [0], [1], [0, 0, 1, 1], [], []>} : vector<16x64xbf16>, vector<64x16xbf16>, vector<16x16xf32> -> vector<16x16xf32>
    %78 = vector.shape_cast %71 : vector<16x16xf32> to vector<2x8x16xf32>
    %79 = vector.shape_cast %74 : vector<16x16xf32> to vector<2x8x16xf32>
    %80 = vector.shape_cast %77 : vector<16x16xf32> to vector<2x8x16xf32>
    "tpu.trace_start"() <{level = 10 : i32, message = "bqd,bkd->bqk"}> : () -> ()
    %cst_53 = arith.constant dense<0.000000e+00> : vector<2x8x8xf32>
    %81 = tpu.matmul %78, %79, %cst_53 {dimension_numbers = #tpu.dot_dimension_numbers<[2], [2], [1], [1], [0, 0, 0, 1, 1, 1], [0], [0]>} : vector<2x8x16xf32>, vector<2x8x16xf32>, vector<2x8x8xf32> -> vector<2x8x8xf32>
    "tpu.trace_stop"() : () -> ()
    %cst_54 = arith.constant 2.500000e-01 : f32
    %82 = vector.broadcast %cst_54 : f32 to vector<2x8x8xf32>
    %83 = arith.mulf %81, %82 : vector<2x8x8xf32>
    %cst_55 = arith.constant -1.000000e+30 : f32
    %84 = vector.shape_cast %32 : vector<1x8x8xi1> to vector<1x8x8xi1>
    %85 = vector.broadcast %84 : vector<1x8x8xi1> to vector<2x8x8xi1>
    %86 = vector.broadcast %cst_55 : f32 to vector<2x8x8xf32>
    %87 = arith.select %85, %83, %86 : vector<2x8x8xi1>, vector<2x8x8xf32>
    %cst_56 = arith.constant dense<0xFF800000> : vector<2x8xf32>
    %88 = vector.multi_reduction <maximumf>, %87, %cst_56 [2] : vector<2x8x8xf32> to vector<2x8xf32>
    %89 = vector.shape_cast %88 : vector<2x8xf32> to vector<2x8x1xf32>
    %90 = vector.broadcast %89 : vector<2x8x1xf32> to vector<2x8x8xf32>
    %91 = arith.subf %87, %90 : vector<2x8x8xf32>
    %92 = math.exp %91 : vector<2x8x8xf32>
    %cst_57 = arith.constant dense<0.000000e+00> : vector<2x8xf32>
    %93 = vector.multi_reduction <add>, %92, %cst_57 [2] : vector<2x8x8xf32> to vector<2x8xf32>
    %94 = vector.shape_cast %93 : vector<2x8xf32> to vector<2x8x1xf32>
    %95 = vector.broadcast %94 : vector<2x8x1xf32> to vector<2x8x8xf32>
    %96 = arith.divf %92, %95 : vector<2x8x8xf32>
    "tpu.trace_start"() <{level = 10 : i32, message = "bqk,bkd->bqd"}> : () -> ()
    %cst_58 = arith.constant dense<0.000000e+00> : vector<2x8x16xf32>
    %97 = tpu.matmul %96, %80, %cst_58 {dimension_numbers = #tpu.dot_dimension_numbers<[2], [1], [1], [2], [0, 0, 0, 1, 1, 2], [0], [0]>} : vector<2x8x8xf32>, vector<2x8x16xf32>, vector<2x8x16xf32> -> vector<2x8x16xf32>
    "tpu.trace_stop"() : () -> ()
    %98 = vector.shape_cast %97 : vector<2x8x16xf32> to vector<16x16xf32>
    %99 = arith.truncf %98 : vector<16x16xf32> to vector<16x16xbf16>
    %c0_59 = arith.constant 0 : index
    %c1_60 = arith.constant 1 : index
    %c0_61 = arith.constant 0 : index
    %c0_62 = arith.constant 0 : index
    %100 = vector.load %arg7[%c0_59, %c1_60, %c0_61, %c0_62] : memref<1x4x16x64xbf16, #tpu.memory_space<vmem>>, vector<1x1x16x64xbf16>
    %101 = vector.shape_cast %100 : vector<1x1x16x64xbf16> to vector<16x64xbf16>
    %cst_63 = arith.constant dense<0.000000e+00> : vector<16x64xf32>
    %102 = tpu.matmul %99, %101, %cst_63 {dimension_numbers = #tpu.dot_dimension_numbers<[1], [0], [0], [1], [0, 0, 1, 1], [], []>} : vector<16x16xbf16>, vector<16x64xbf16>, vector<16x64xf32> -> vector<16x64xf32>
    %103 = arith.addf %68, %102 : vector<16x64xf32>
    %c0_64 = arith.constant 0 : index
    %c2 = arith.constant 2 : index
    %c0_65 = arith.constant 0 : index
    %c0_66 = arith.constant 0 : index
    %104 = vector.load %arg4[%c0_64, %c2, %c0_65, %c0_66] : memref<1x4x64x16xbf16, #tpu.memory_space<vmem>>, vector<1x1x64x16xbf16>
    %105 = vector.shape_cast %104 : vector<1x1x64x16xbf16> to vector<64x16xbf16>
    %cst_67 = arith.constant dense<0.000000e+00> : vector<16x16xf32>
    %106 = tpu.matmul %28, %105, %cst_67 {dimension_numbers = #tpu.dot_dimension_numbers<[1], [0], [0], [1], [0, 0, 1, 1], [], []>} : vector<16x64xbf16>, vector<64x16xbf16>, vector<16x16xf32> -> vector<16x16xf32>
    %c0_68 = arith.constant 0 : index
    %c2_69 = arith.constant 2 : index
    %c0_70 = arith.constant 0 : index
    %c0_71 = arith.constant 0 : index
    %107 = vector.load %arg5[%c0_68, %c2_69, %c0_70, %c0_71] : memref<1x4x64x16xbf16, #tpu.memory_space<vmem>>, vector<1x1x64x16xbf16>
    %108 = vector.shape_cast %107 : vector<1x1x64x16xbf16> to vector<64x16xbf16>
    %cst_72 = arith.constant dense<0.000000e+00> : vector<16x16xf32>
    %109 = tpu.matmul %28, %108, %cst_72 {dimension_numbers = #tpu.dot_dimension_numbers<[1], [0], [0], [1], [0, 0, 1, 1], [], []>} : vector<16x64xbf16>, vector<64x16xbf16>, vector<16x16xf32> -> vector<16x16xf32>
    %c0_73 = arith.constant 0 : index
    %c2_74 = arith.constant 2 : index
    %c0_75 = arith.constant 0 : index
    %c0_76 = arith.constant 0 : index
    %110 = vector.load %arg6[%c0_73, %c2_74, %c0_75, %c0_76] : memref<1x4x64x16xbf16, #tpu.memory_space<vmem>>, vector<1x1x64x16xbf16>
    %111 = vector.shape_cast %110 : vector<1x1x64x16xbf16> to vector<64x16xbf16>
    %cst_77 = arith.constant dense<0.000000e+00> : vector<16x16xf32>
    %112 = tpu.matmul %28, %111, %cst_77 {dimension_numbers = #tpu.dot_dimension_numbers<[1], [0], [0], [1], [0, 0, 1, 1], [], []>} : vector<16x64xbf16>, vector<64x16xbf16>, vector<16x16xf32> -> vector<16x16xf32>
    %113 = vector.shape_cast %106 : vector<16x16xf32> to vector<2x8x16xf32>
    %114 = vector.shape_cast %109 : vector<16x16xf32> to vector<2x8x16xf32>
    %115 = vector.shape_cast %112 : vector<16x16xf32> to vector<2x8x16xf32>
    "tpu.trace_start"() <{level = 10 : i32, message = "bqd,bkd->bqk"}> : () -> ()
    %cst_78 = arith.constant dense<0.000000e+00> : vector<2x8x8xf32>
    %116 = tpu.matmul %113, %114, %cst_78 {dimension_numbers = #tpu.dot_dimension_numbers<[2], [2], [1], [1], [0, 0, 0, 1, 1, 1], [0], [0]>} : vector<2x8x16xf32>, vector<2x8x16xf32>, vector<2x8x8xf32> -> vector<2x8x8xf32>
    "tpu.trace_stop"() : () -> ()
    %cst_79 = arith.constant 2.500000e-01 : f32
    %117 = vector.broadcast %cst_79 : f32 to vector<2x8x8xf32>
    %118 = arith.mulf %116, %117 : vector<2x8x8xf32>
    %cst_80 = arith.constant -1.000000e+30 : f32
    %119 = vector.shape_cast %32 : vector<1x8x8xi1> to vector<1x8x8xi1>
    %120 = vector.broadcast %119 : vector<1x8x8xi1> to vector<2x8x8xi1>
    %121 = vector.broadcast %cst_80 : f32 to vector<2x8x8xf32>
    %122 = arith.select %120, %118, %121 : vector<2x8x8xi1>, vector<2x8x8xf32>
    %cst_81 = arith.constant dense<0xFF800000> : vector<2x8xf32>
    %123 = vector.multi_reduction <maximumf>, %122, %cst_81 [2] : vector<2x8x8xf32> to vector<2x8xf32>
    %124 = vector.shape_cast %123 : vector<2x8xf32> to vector<2x8x1xf32>
    %125 = vector.broadcast %124 : vector<2x8x1xf32> to vector<2x8x8xf32>
    %126 = arith.subf %122, %125 : vector<2x8x8xf32>
    %127 = math.exp %126 : vector<2x8x8xf32>
    %cst_82 = arith.constant dense<0.000000e+00> : vector<2x8xf32>
    %128 = vector.multi_reduction <add>, %127, %cst_82 [2] : vector<2x8x8xf32> to vector<2x8xf32>
    %129 = vector.shape_cast %128 : vector<2x8xf32> to vector<2x8x1xf32>
    %130 = vector.broadcast %129 : vector<2x8x1xf32> to vector<2x8x8xf32>
    %131 = arith.divf %127, %130 : vector<2x8x8xf32>
    "tpu.trace_start"() <{level = 10 : i32, message = "bqk,bkd->bqd"}> : () -> ()
    %cst_83 = arith.constant dense<0.000000e+00> : vector<2x8x16xf32>
    %132 = tpu.matmul %131, %115, %cst_83 {dimension_numbers = #tpu.dot_dimension_numbers<[2], [1], [1], [2], [0, 0, 0, 1, 1, 2], [0], [0]>} : vector<2x8x8xf32>, vector<2x8x16xf32>, vector<2x8x16xf32> -> vector<2x8x16xf32>
    "tpu.trace_stop"() : () -> ()
    %133 = vector.shape_cast %132 : vector<2x8x16xf32> to vector<16x16xf32>
    %134 = arith.truncf %133 : vector<16x16xf32> to vector<16x16xbf16>
    %c0_84 = arith.constant 0 : index
    %c2_85 = arith.constant 2 : index
    %c0_86 = arith.constant 0 : index
    %c0_87 = arith.constant 0 : index
    %135 = vector.load %arg7[%c0_84, %c2_85, %c0_86, %c0_87] : memref<1x4x16x64xbf16, #tpu.memory_space<vmem>>, vector<1x1x16x64xbf16>
    %136 = vector.shape_cast %135 : vector<1x1x16x64xbf16> to vector<16x64xbf16>
    %cst_88 = arith.constant dense<0.000000e+00> : vector<16x64xf32>
    %137 = tpu.matmul %134, %136, %cst_88 {dimension_numbers = #tpu.dot_dimension_numbers<[1], [0], [0], [1], [0, 0, 1, 1], [], []>} : vector<16x16xbf16>, vector<16x64xbf16>, vector<16x64xf32> -> vector<16x64xf32>
    %138 = arith.addf %103, %137 : vector<16x64xf32>
    %c0_89 = arith.constant 0 : index
    %c3 = arith.constant 3 : index
    %c0_90 = arith.constant 0 : index
    %c0_91 = arith.constant 0 : index
    %139 = vector.load %arg4[%c0_89, %c3, %c0_90, %c0_91] : memref<1x4x64x16xbf16, #tpu.memory_space<vmem>>, vector<1x1x64x16xbf16>
    %140 = vector.shape_cast %139 : vector<1x1x64x16xbf16> to vector<64x16xbf16>
    %cst_92 = arith.constant dense<0.000000e+00> : vector<16x16xf32>
    %141 = tpu.matmul %28, %140, %cst_92 {dimension_numbers = #tpu.dot_dimension_numbers<[1], [0], [0], [1], [0, 0, 1, 1], [], []>} : vector<16x64xbf16>, vector<64x16xbf16>, vector<16x16xf32> -> vector<16x16xf32>
    %c0_93 = arith.constant 0 : index
    %c3_94 = arith.constant 3 : index
    %c0_95 = arith.constant 0 : index
    %c0_96 = arith.constant 0 : index
    %142 = vector.load %arg5[%c0_93, %c3_94, %c0_95, %c0_96] : memref<1x4x64x16xbf16, #tpu.memory_space<vmem>>, vector<1x1x64x16xbf16>
    %143 = vector.shape_cast %142 : vector<1x1x64x16xbf16> to vector<64x16xbf16>
    %cst_97 = arith.constant dense<0.000000e+00> : vector<16x16xf32>
    %144 = tpu.matmul %28, %143, %cst_97 {dimension_numbers = #tpu.dot_dimension_numbers<[1], [0], [0], [1], [0, 0, 1, 1], [], []>} : vector<16x64xbf16>, vector<64x16xbf16>, vector<16x16xf32> -> vector<16x16xf32>
    %c0_98 = arith.constant 0 : index
    %c3_99 = arith.constant 3 : index
    %c0_100 = arith.constant 0 : index
    %c0_101 = arith.constant 0 : index
    %145 = vector.load %arg6[%c0_98, %c3_99, %c0_100, %c0_101] : memref<1x4x64x16xbf16, #tpu.memory_space<vmem>>, vector<1x1x64x16xbf16>
    %146 = vector.shape_cast %145 : vector<1x1x64x16xbf16> to vector<64x16xbf16>
    %cst_102 = arith.constant dense<0.000000e+00> : vector<16x16xf32>
    %147 = tpu.matmul %28, %146, %cst_102 {dimension_numbers = #tpu.dot_dimension_numbers<[1], [0], [0], [1], [0, 0, 1, 1], [], []>} : vector<16x64xbf16>, vector<64x16xbf16>, vector<16x16xf32> -> vector<16x16xf32>
    %148 = vector.shape_cast %141 : vector<16x16xf32> to vector<2x8x16xf32>
    %149 = vector.shape_cast %144 : vector<16x16xf32> to vector<2x8x16xf32>
    %150 = vector.shape_cast %147 : vector<16x16xf32> to vector<2x8x16xf32>
    "tpu.trace_start"() <{level = 10 : i32, message = "bqd,bkd->bqk"}> : () -> ()
    %cst_103 = arith.constant dense<0.000000e+00> : vector<2x8x8xf32>
    %151 = tpu.matmul %148, %149, %cst_103 {dimension_numbers = #tpu.dot_dimension_numbers<[2], [2], [1], [1], [0, 0, 0, 1, 1, 1], [0], [0]>} : vector<2x8x16xf32>, vector<2x8x16xf32>, vector<2x8x8xf32> -> vector<2x8x8xf32>
    "tpu.trace_stop"() : () -> ()
    %cst_104 = arith.constant 2.500000e-01 : f32
    %152 = vector.broadcast %cst_104 : f32 to vector<2x8x8xf32>
    %153 = arith.mulf %151, %152 : vector<2x8x8xf32>
    %cst_105 = arith.constant -1.000000e+30 : f32
    %154 = vector.shape_cast %32 : vector<1x8x8xi1> to vector<1x8x8xi1>
    %155 = vector.broadcast %154 : vector<1x8x8xi1> to vector<2x8x8xi1>
    %156 = vector.broadcast %cst_105 : f32 to vector<2x8x8xf32>
    %157 = arith.select %155, %153, %156 : vector<2x8x8xi1>, vector<2x8x8xf32>
    %cst_106 = arith.constant dense<0xFF800000> : vector<2x8xf32>
    %158 = vector.multi_reduction <maximumf>, %157, %cst_106 [2] : vector<2x8x8xf32> to vector<2x8xf32>
    %159 = vector.shape_cast %158 : vector<2x8xf32> to vector<2x8x1xf32>
    %160 = vector.broadcast %159 : vector<2x8x1xf32> to vector<2x8x8xf32>
    %161 = arith.subf %157, %160 : vector<2x8x8xf32>
    %162 = math.exp %161 : vector<2x8x8xf32>
    %cst_107 = arith.constant dense<0.000000e+00> : vector<2x8xf32>
    %163 = vector.multi_reduction <add>, %162, %cst_107 [2] : vector<2x8x8xf32> to vector<2x8xf32>
    %164 = vector.shape_cast %163 : vector<2x8xf32> to vector<2x8x1xf32>
    %165 = vector.broadcast %164 : vector<2x8x1xf32> to vector<2x8x8xf32>
    %166 = arith.divf %162, %165 : vector<2x8x8xf32>
    "tpu.trace_start"() <{level = 10 : i32, message = "bqk,bkd->bqd"}> : () -> ()
    %cst_108 = arith.constant dense<0.000000e+00> : vector<2x8x16xf32>
    %167 = tpu.matmul %166, %150, %cst_108 {dimension_numbers = #tpu.dot_dimension_numbers<[2], [1], [1], [2], [0, 0, 0, 1, 1, 2], [0], [0]>} : vector<2x8x8xf32>, vector<2x8x16xf32>, vector<2x8x16xf32> -> vector<2x8x16xf32>
    "tpu.trace_stop"() : () -> ()
    %168 = vector.shape_cast %167 : vector<2x8x16xf32> to vector<16x16xf32>
    %169 = arith.truncf %168 : vector<16x16xf32> to vector<16x16xbf16>
    %c0_109 = arith.constant 0 : index
    %c3_110 = arith.constant 3 : index
    %c0_111 = arith.constant 0 : index
    %c0_112 = arith.constant 0 : index
    %170 = vector.load %arg7[%c0_109, %c3_110, %c0_111, %c0_112] : memref<1x4x16x64xbf16, #tpu.memory_space<vmem>>, vector<1x1x16x64xbf16>
    %171 = vector.shape_cast %170 : vector<1x1x16x64xbf16> to vector<16x64xbf16>
    %cst_113 = arith.constant dense<0.000000e+00> : vector<16x64xf32>
    %172 = tpu.matmul %169, %171, %cst_113 {dimension_numbers = #tpu.dot_dimension_numbers<[1], [0], [0], [1], [0, 0, 1, 1], [], []>} : vector<16x16xbf16>, vector<16x64xbf16>, vector<16x64xf32> -> vector<16x64xf32>
    %173 = arith.addf %138, %172 : vector<16x64xf32>
    %174 = arith.addf %3, %173 : vector<16x64xf32>
    %c0_114 = arith.constant 0 : index
    %c0_115 = arith.constant 0 : index
    %c0_116 = arith.constant 0 : index
    %175 = vector.load %arg8[%c0_114, %c0_115, %c0_116] : memref<1x1x64xf32, #tpu.memory_space<vmem>>, vector<1x1x64xf32>
    %176 = vector.shape_cast %175 : vector<1x1x64xf32> to vector<1x64xf32>
    %c0_117 = arith.constant 0 : index
    %c0_118 = arith.constant 0 : index
    %c0_119 = arith.constant 0 : index
    %177 = vector.load %arg9[%c0_117, %c0_118, %c0_119] : memref<1x1x64xf32, #tpu.memory_space<vmem>>, vector<1x1x64xf32>
    %178 = vector.shape_cast %177 : vector<1x1x64xf32> to vector<1x64xf32>
    %cst_120 = arith.constant dense<0.000000e+00> : vector<16xf32>
    %179 = vector.multi_reduction <add>, %174, %cst_120 [1] : vector<16x64xf32> to vector<16xf32>
    %180 = vector.shape_cast %179 : vector<16xf32> to vector<16x1xf32>
    %cst_121 = arith.constant 6.400000e+01 : f32
    %181 = vector.broadcast %cst_121 : f32 to vector<16x1xf32>
    %182 = arith.divf %180, %181 : vector<16x1xf32>
    %183 = vector.broadcast %182 : vector<16x1xf32> to vector<16x64xf32>
    %184 = arith.subf %174, %183 : vector<16x64xf32>
    %185 = arith.mulf %184, %184 : vector<16x64xf32>
    %cst_122 = arith.constant dense<0.000000e+00> : vector<16xf32>
    %186 = vector.multi_reduction <add>, %185, %cst_122 [1] : vector<16x64xf32> to vector<16xf32>
    %187 = vector.shape_cast %186 : vector<16xf32> to vector<16x1xf32>
    %cst_123 = arith.constant 6.400000e+01 : f32
    %188 = vector.broadcast %cst_123 : f32 to vector<16x1xf32>
    %189 = arith.divf %187, %188 : vector<16x1xf32>
    %cst_124 = arith.constant 9.99999974E-6 : f32
    %190 = vector.broadcast %cst_124 : f32 to vector<16x1xf32>
    %191 = arith.addf %189, %190 : vector<16x1xf32>
    %192 = math.rsqrt %191 : vector<16x1xf32>
    %193 = vector.broadcast %192 : vector<16x1xf32> to vector<16x64xf32>
    %194 = arith.mulf %184, %193 : vector<16x64xf32>
    %195 = vector.broadcast %176 : vector<1x64xf32> to vector<16x64xf32>
    %196 = arith.mulf %194, %195 : vector<16x64xf32>
    %197 = vector.broadcast %178 : vector<1x64xf32> to vector<16x64xf32>
    %198 = arith.addf %196, %197 : vector<16x64xf32>
    %199 = arith.truncf %198 : vector<16x64xf32> to vector<16x64xbf16>
    %c0_125 = arith.constant 0 : index
    %c0_126 = arith.constant 0 : index
    %c0_127 = arith.constant 0 : index
    %200 = vector.load %arg10[%c0_125, %c0_126, %c0_127] : memref<1x64x256xbf16, #tpu.memory_space<vmem>>, vector<1x64x256xbf16>
    %201 = vector.shape_cast %200 : vector<1x64x256xbf16> to vector<64x256xbf16>
    %cst_128 = arith.constant dense<0.000000e+00> : vector<16x256xf32>
    %202 = tpu.matmul %199, %201, %cst_128 {dimension_numbers = #tpu.dot_dimension_numbers<[1], [0], [0], [1], [0, 0, 1, 1], [], []>} : vector<16x64xbf16>, vector<64x256xbf16>, vector<16x256xf32> -> vector<16x256xf32>
    %cst_129 = arith.constant 5.000000e-01 : f32
    %203 = vector.broadcast %cst_129 : f32 to vector<16x256xf32>
    %204 = arith.mulf %203, %202 : vector<16x256xf32>
    %cst_130 = arith.constant 4.471500e-02 : f32
    %205 = vector.broadcast %cst_130 : f32 to vector<16x256xf32>
    %206 = arith.mulf %205, %202 : vector<16x256xf32>
    %207 = arith.mulf %206, %202 : vector<16x256xf32>
    %208 = arith.mulf %207, %202 : vector<16x256xf32>
    %209 = arith.addf %202, %208 : vector<16x256xf32>
    %cst_131 = arith.constant 0.797884583 : f32
    %210 = vector.broadcast %cst_131 : f32 to vector<16x256xf32>
    %211 = arith.mulf %210, %209 : vector<16x256xf32>
    %212 = math.tanh %211 : vector<16x256xf32>
    %cst_132 = arith.constant 1.000000e+00 : f32
    %213 = vector.broadcast %cst_132 : f32 to vector<16x256xf32>
    %214 = arith.addf %213, %212 : vector<16x256xf32>
    %215 = arith.mulf %204, %214 : vector<16x256xf32>
    %216 = arith.truncf %215 : vector<16x256xf32> to vector<16x256xbf16>
    %c0_133 = arith.constant 0 : index
    %c0_134 = arith.constant 0 : index
    %c0_135 = arith.constant 0 : index
    %217 = vector.load %arg11[%c0_133, %c0_134, %c0_135] : memref<1x256x64xbf16, #tpu.memory_space<vmem>>, vector<1x256x64xbf16>
    %218 = vector.shape_cast %217 : vector<1x256x64xbf16> to vector<256x64xbf16>
    %cst_136 = arith.constant dense<0.000000e+00> : vector<16x64xf32>
    %219 = tpu.matmul %216, %218, %cst_136 {dimension_numbers = #tpu.dot_dimension_numbers<[1], [0], [0], [1], [0, 0, 1, 1], [], []>} : vector<16x256xbf16>, vector<256x64xbf16>, vector<16x64xf32> -> vector<16x64xf32>
    %220 = arith.addf %174, %219 : vector<16x64xf32>
    %c0_137 = arith.constant 0 : index
    %c0_138 = arith.constant 0 : index
    %221 = vector.load %arg16[%c0_137, %c0_138] : memref<16x64xf32, #tpu.memory_space<vmem>>, vector<16x64xf32>
    tpu.vector_store %arg16[%c0_137, %c0_138], %220 {strides = array<i32>} : memref<16x64xf32, #tpu.memory_space<vmem>>, vector<16x64xf32>,
    %c3_i32 = arith.constant 3 : i32
    %222 = arith.cmpi eq, %arg0, %c3_i32 : i32
    %223 = arith.extui %222 : i1 to i32
    %c0_i32_139 = arith.constant 0 : i32
    %224 = arith.cmpi ne, %223, %c0_i32_139 : i32
    scf.if %224 {
      %c0_140 = arith.constant 0 : index
      %c0_141 = arith.constant 0 : index
      %225 = vector.load %arg12[%c0_140, %c0_141] : memref<1x64xf32, #tpu.memory_space<vmem>>, vector<1x64xf32>
      %c0_142 = arith.constant 0 : index
      %c0_143 = arith.constant 0 : index
      %226 = vector.load %arg13[%c0_142, %c0_143] : memref<1x64xf32, #tpu.memory_space<vmem>>, vector<1x64xf32>
      %cst_144 = arith.constant dense<0.000000e+00> : vector<16xf32>
      %227 = vector.multi_reduction <add>, %220, %cst_144 [1] : vector<16x64xf32> to vector<16xf32>
      %228 = vector.shape_cast %227 : vector<16xf32> to vector<16x1xf32>
      %cst_145 = arith.constant 6.400000e+01 : f32
      %229 = vector.broadcast %cst_145 : f32 to vector<16x1xf32>
      %230 = arith.divf %228, %229 : vector<16x1xf32>
      %231 = vector.broadcast %230 : vector<16x1xf32> to vector<16x64xf32>
      %232 = arith.subf %220, %231 : vector<16x64xf32>
      %233 = arith.mulf %232, %232 : vector<16x64xf32>
      %cst_146 = arith.constant dense<0.000000e+00> : vector<16xf32>
      %234 = vector.multi_reduction <add>, %233, %cst_146 [1] : vector<16x64xf32> to vector<16xf32>
      %235 = vector.shape_cast %234 : vector<16xf32> to vector<16x1xf32>
      %cst_147 = arith.constant 6.400000e+01 : f32
      %236 = vector.broadcast %cst_147 : f32 to vector<16x1xf32>
      %237 = arith.divf %235, %236 : vector<16x1xf32>
      %cst_148 = arith.constant 9.99999974E-6 : f32
      %238 = vector.broadcast %cst_148 : f32 to vector<16x1xf32>
      %239 = arith.addf %237, %238 : vector<16x1xf32>
      %240 = math.rsqrt %239 : vector<16x1xf32>
      %241 = vector.broadcast %240 : vector<16x1xf32> to vector<16x64xf32>
      %242 = arith.mulf %232, %241 : vector<16x64xf32>
      %243 = vector.broadcast %225 : vector<1x64xf32> to vector<16x64xf32>
      %244 = arith.mulf %242, %243 : vector<16x64xf32>
      %245 = vector.broadcast %226 : vector<1x64xf32> to vector<16x64xf32>
      %246 = arith.addf %244, %245 : vector<16x64xf32>
      %247 = arith.truncf %246 : vector<16x64xf32> to vector<16x64xbf16>
      %c0_149 = arith.constant 0 : index
      %c0_150 = arith.constant 0 : index
      %248 = vector.load %arg14[%c0_149, %c0_150] : memref<64x128xbf16, #tpu.memory_space<vmem>>, vector<64x128xbf16>
      %cst_151 = arith.constant dense<0.000000e+00> : vector<16x128xf32>
      %249 = tpu.matmul %247, %248, %cst_151 {dimension_numbers = #tpu.dot_dimension_numbers<[1], [0], [0], [1], [0, 0, 1, 1], [], []>} : vector<16x64xbf16>, vector<64x128xbf16>, vector<16x128xf32> -> vector<16x128xf32>
      %c0_152 = arith.constant 0 : index
      %c0_153 = arith.constant 0 : index
      %250 = vector.load %arg15[%c0_152, %c0_153] : memref<16x128xf32, #tpu.memory_space<vmem>>, vector<16x128xf32>
      tpu.vector_store %arg15[%c0_152, %c0_153], %249 {strides = array<i32>} : memref<16x128xf32, #tpu.memory_space<vmem>>, vector<16x128xf32>,
    } else {
    }
    return
  }
  func.func @transform_0(%arg0: i32) -> (i32, i32) {
    %c0_i32 = arith.constant 0 : i32
    %c0_i32_0 = arith.constant 0 : i32
    %c0_i32_1 = arith.constant 0 : i32
    return %c0_i32, %c0_i32_0 : i32, i32
  }
  func.func @transform_1(%arg0: i32) -> (i32, i32, i32) {
    %c0_i32 = arith.constant 0 : i32
    %c0_i32_0 = arith.constant 0 : i32
    %c0_i32_1 = arith.constant 0 : i32
    return %arg0, %c0_i32, %c0_i32_0 : i32, i32, i32
  }
  func.func @transform_2(%arg0: i32) -> (i32, i32, i32) {
    %c0_i32 = arith.constant 0 : i32
    %c0_i32_0 = arith.constant 0 : i32
    %c0_i32_1 = arith.constant 0 : i32
    return %arg0, %c0_i32, %c0_i32_0 : i32, i32, i32
  }
  func.func @transform_3(%arg0: i32) -> (i32, i32, i32, i32) {
    %c0_i32 = arith.constant 0 : i32
    %c0_i32_0 = arith.constant 0 : i32
    %c0_i32_1 = arith.constant 0 : i32
    %c0_i32_2 = arith.constant 0 : i32
    return %arg0, %c0_i32, %c0_i32_0, %c0_i32_1 : i32, i32, i32, i32
  }
  func.func @transform_4(%arg0: i32) -> (i32, i32, i32, i32) {
    %c0_i32 = arith.constant 0 : i32
    %c0_i32_0 = arith.constant 0 : i32
    %c0_i32_1 = arith.constant 0 : i32
    %c0_i32_2 = arith.constant 0 : i32
    return %arg0, %c0_i32, %c0_i32_0, %c0_i32_1 : i32, i32, i32, i32
  }
  func.func @transform_5(%arg0: i32) -> (i32, i32, i32, i32) {
    %c0_i32 = arith.constant 0 : i32
    %c0_i32_0 = arith.constant 0 : i32
    %c0_i32_1 = arith.constant 0 : i32
    %c0_i32_2 = arith.constant 0 : i32
    return %arg0, %c0_i32, %c0_i32_0, %c0_i32_1 : i32, i32, i32, i32
  }
  func.func @transform_6(%arg0: i32) -> (i32, i32, i32, i32) {
    %c0_i32 = arith.constant 0 : i32
    %c0_i32_0 = arith.constant 0 : i32
    %c0_i32_1 = arith.constant 0 : i32
    %c0_i32_2 = arith.constant 0 : i32
    return %arg0, %c0_i32, %c0_i32_0, %c0_i32_1 : i32, i32, i32, i32
  }
  func.func @transform_7(%arg0: i32) -> (i32, i32, i32) {
    %c0_i32 = arith.constant 0 : i32
    %c0_i32_0 = arith.constant 0 : i32
    %c0_i32_1 = arith.constant 0 : i32
    return %arg0, %c0_i32, %c0_i32_0 : i32, i32, i32
  }
  func.func @transform_8(%arg0: i32) -> (i32, i32, i32) {
    %c0_i32 = arith.constant 0 : i32
    %c0_i32_0 = arith.constant 0 : i32
    %c0_i32_1 = arith.constant 0 : i32
    return %arg0, %c0_i32, %c0_i32_0 : i32, i32, i32
  }
  func.func @transform_9(%arg0: i32) -> (i32, i32, i32) {
    %c0_i32 = arith.constant 0 : i32
    %c0_i32_0 = arith.constant 0 : i32
    %c0_i32_1 = arith.constant 0 : i32
    return %arg0, %c0_i32, %c0_i32_0 : i32, i32, i32
  }
  func.func @transform_10(%arg0: i32) -> (i32, i32, i32) {
    %c0_i32 = arith.constant 0 : i32
    %c0_i32_0 = arith.constant 0 : i32
    %c0_i32_1 = arith.constant 0 : i32
    return %arg0, %c0_i32, %c0_i32_0 : i32, i32, i32
  }
  func.func @transform_11(%arg0: i32) -> (i32, i32) {
    %c0_i32 = arith.constant 0 : i32
    %c0_i32_0 = arith.constant 0 : i32
    %c0_i32_1 = arith.constant 0 : i32
    return %c0_i32, %c0_i32_0 : i32, i32
  }
  func.func @transform_12(%arg0: i32) -> (i32, i32) {
    %c0_i32 = arith.constant 0 : i32
    %c0_i32_0 = arith.constant 0 : i32
    %c0_i32_1 = arith.constant 0 : i32
    return %c0_i32, %c0_i32_0 : i32, i32
  }
  func.func @transform_13(%arg0: i32) -> (i32, i32) {
    %c0_i32 = arith.constant 0 : i32
    %c0_i32_0 = arith.constant 0 : i32
    %c0_i32_1 = arith.constant 0 : i32
    return %c0_i32, %c0_i32_0 : i32, i32
  }
  func.func @transform_14(%arg0: i32) -> (i32, i32) {
    %c0_i32 = arith.constant 0 : i32
    %c0_i32_0 = arith.constant 0 : i32
    %c0_i32_1 = arith.constant 0 : i32
    return %c0_i32, %c0_i32_0 : i32, i32
  }
}

</mosaic_0001>

<llo_original>
// kernel: tpu_custom_call.1
$region0: #{tpu_custom_call.1}
  #allocation0 [shape = 'u32[]', space=smem, size = 0x4, offset = 0x4, fixed_abs, tag = 'smem constant byte address 0x4 - core index']
  #allocation1 [shape = 'u32[72,128]{1,0:T(1,128)}', space=vmem, size = 0x9000, scoped, tag = 'internal scratch']
  #allocation2 [shape = 'f32[16,64]{1,0:T(8,128)}', space=vmem, size = 0x2000, scoped, tag = 'scratch operand']
  %s0 = inlined_call_operand.vmem [shape: f32[16,64], index: 0, kind: input, shape index: {}]
  %s1 = inlined_call_operand.vmem [shape: f32[4,1,64], index: 1, kind: input, shape index: {}]
  %s2 = inlined_call_operand.vmem [shape: f32[4,1,64], index: 2, kind: input, shape index: {}]
  %s3 = inlined_call_operand.vmem [shape: bf16[4,4,64,16], index: 3, kind: input, shape index: {}]
  %s4 = inlined_call_operand.vmem [shape: bf16[4,4,64,16], index: 4, kind: input, shape index: {}]
  %s5 = inlined_call_operand.vmem [shape: bf16[4,4,64,16], index: 5, kind: input, shape index: {}]
  %s6 = inlined_call_operand.vmem [shape: bf16[4,4,16,64], index: 6, kind: input, shape index: {}]
  %s7 = inlined_call_operand.vmem [shape: f32[4,1,64], index: 7, kind: input, shape index: {}]
  %s8 = inlined_call_operand.vmem [shape: f32[4,1,64], index: 8, kind: input, shape index: {}]
  %s9 = inlined_call_operand.vmem [shape: bf16[4,64,256], index: 9, kind: input, shape index: {}]
  %s10 = inlined_call_operand.vmem [shape: bf16[4,256,64], index: 10, kind: input, shape index: {}]
  %s11 = inlined_call_operand.vmem [shape: f32[1,64], index: 11, kind: input, shape index: {}]
  %s12 = inlined_call_operand.vmem [shape: f32[1,64], index: 12, kind: input, shape index: {}]
  %s13 = inlined_call_operand.vmem [shape: bf16[64,128], index: 13, kind: input, shape index: {}]
  %s14 = inlined_call_operand.hbm [shape: f32[16,128], index: 14, kind: output, shape index: {}]
  %s15 = sld [smem:[#allocation0]]
  $region97: #{tpu_custom_call.1} parent=0
    _
  %s17 = ssub.s32 1, %s15
  %s18 = scalar_select 0, %s17, %s15
  $region1: #{tpu_custom_call.1} parent=0
    #allocation3 [shape = 'u8[8192]{0}', space=vmem, size = 0x2000, scoped, tag = 'output window, operand 0, single buffered']
    #allocation4 [shape = 's32[2]{0}', space=sflag, size = 0x8, scoped, tag = 'scoped memory for tpu_custom_call.1']
    %19 = vsyncpa [#allocation4], 0
    loop: start=0, step=1, limit=6
    $region2: #{tpu_custom_call.1} parent=1 // loop_pre_header
      _
    $region3: #{tpu_custom_call.1} parent=1 // loop_header
      %s21 = sphi 0, %s25
      %p22 = scmp.ge.s32.totalorder %s21, 6
      %s29 = sphi 0, %s29
      %s31 = sphi 0, %s29
      %s32 = sphi 0, %s31
      %s46 = sphi 0, %s32
      %s52 = sphi 0, %s54
      %s55 = sphi 0, %s52
      %s56 = sphi 0, %s55
      %s72 = sphi 0, %s56
      %s78 = sphi 0, %s80
      %s81 = sphi 0, %s78
      %s82 = sphi 0, %s81
      %s98 = sphi 0, %s82
      %s104 = sphi 0, %s106
      %s107 = sphi 0, %s104
      %s108 = sphi 0, %s107
      %s124 = sphi 0, %s108
      %s130 = sphi 0, %s132
      %s133 = sphi 0, %s130
      %s134 = sphi 0, %s133
      %s150 = sphi 0, %s134
      %s156 = sphi 0, %s158
      %s159 = sphi 0, %s156
      %s160 = sphi 0, %s159
      %s176 = sphi 0, %s160
      %s182 = sphi 0, %s184
      %s185 = sphi 0, %s182
      %s186 = sphi 0, %s185
      %s202 = sphi 0, %s186
      %s208 = sphi 0, %s210
      %s211 = sphi 0, %s208
      %s212 = sphi 0, %s211
      %s228 = sphi 0, %s212
      %s234 = sphi 0, %s236
      %s237 = sphi 0, %s234
      %s238 = sphi 0, %s237
      %s254 = sphi 0, %s238
      %s260 = sphi 0, %s262
      %s263 = sphi 0, %s260
      %s264 = sphi 0, %s263
      %s280 = sphi 0, %s264
      %s286 = sphi 0, %s288
      %s289 = sphi 0, %s286
      %s290 = sphi 0, %s289
      %s306 = sphi 0, %s290
      %s310 = sphi 0, %s310
      %s312 = sphi 0, %s310
      %s313 = sphi 0, %s312
      %s327 = sphi 0, %s313
      %s331 = sphi 0, %s331
      %s333 = sphi 0, %s331
      %s334 = sphi 0, %s333
      %s348 = sphi 0, %s334
      %s352 = sphi 0, %s352
      %s354 = sphi 0, %s352
      %s355 = sphi 0, %s354
      %s369 = sphi 0, %s355
      %s373 = sphi 0, %s373
      %s375 = sphi 0, %s373
      %s376 = sphi 0, %s375
      %s390 = sphi 0, %s376
    $region4: #{tpu_custom_call.1} parent=1 // loop_header_branch
      %24 = sbr.rel (%p22) target = $region8
    $region5: #{tpu_custom_call.1} parent=1 // loop_body
      %s26 = ssub.s32 %s21, 1
      %s27 = ssub.s32 %s21, 2
      %s28 = sadd.s32 %s21, 1
      %s30 = sadd.s32 %s29, 1
      %p33 = scmp.eq.s32.totalorder %s21, 3
      %p34 = scmp.ne.s32.totalorder %s29, %s31
      %p35 = scmp.eq.s32.totalorder %s21, 0
      %p36 = por %p34, %p35
      %p37 = scmp.ne.s32.totalorder %s29, %s31
      %p38 = scmp.eq.s32.totalorder %s26, 3
      %p39 = por %p37, %p38
      %p40 = scmp.ne.s32.totalorder %s31, %s32
      %p41 = scmp.eq.s32.totalorder %s26, 0
      %p42 = por %p40, %p41
      %p43 = scmp.ne.s32.totalorder %s31, %s32
      %p44 = scmp.eq.s32.totalorder %s27, 3
      %p45 = por %p43, %p44
      %p47 = scmp.ne.s32.totalorder %s32, %s46
      %p48 = scmp.eq.s32.totalorder %s27, 0
      %p49 = por %p47, %p48
      %s50 = ssub.s32 %s21, %s28
      %p51 = scmp.eq.s32.totalorder %s50, 0
      %s53 = sadd.s32 %s52, 1
      %s54 = scalar_select %p51, %s52, %s53
      %p57 = pneg %p51
      %p58 = scmp.eq.s32.totalorder %s21, 3
      %p59 = por %p57, %p58
      %p60 = scmp.ne.s32.totalorder %s52, %s55
      %p61 = scmp.eq.s32.totalorder %s21, 0
      %p62 = por %p60, %p61
      %p63 = scmp.ne.s32.totalorder %s52, %s55
      %p64 = scmp.eq.s32.totalorder %s26, 3
      %p65 = por %p63, %p64
      %p66 = scmp.ne.s32.totalorder %s55, %s56
      %p67 = scmp.eq.s32.totalorder %s26, 0
      %p68 = por %p66, %p67
      %p69 = scmp.ne.s32.totalorder %s55, %s56
      %p70 = scmp.eq.s32.totalorder %s27, 3
      %p71 = por %p69, %p70
      %p73 = scmp.ne.s32.totalorder %s56, %s72
      %p74 = scmp.eq.s32.totalorder %s27, 0
      %p75 = por %p73, %p74
      %s76 = ssub.s32 %s21, %s28
      %p77 = scmp.eq.s32.totalorder %s76, 0
      %s79 = sadd.s32 %s78, 1
      %s80 = scalar_select %p77, %s78, %s79
      %p83 = pneg %p77
      %p84 = scmp.eq.s32.totalorder %s21, 3
      %p85 = por %p83, %p84
      %p86 = scmp.ne.s32.totalorder %s78, %s81
      %p87 = scmp.eq.s32.totalorder %s21, 0
      %p88 = por %p86, %p87
      %p89 = scmp.ne.s32.totalorder %s78, %s81
      %p90 = scmp.eq.s32.totalorder %s26, 3
      %p91 = por %p89, %p90
      %p92 = scmp.ne.s32.totalorder %s81, %s82
      %p93 = scmp.eq.s32.totalorder %s26, 0
      %p94 = por %p92, %p93
      %p95 = scmp.ne.s32.totalorder %s81, %s82
      %p96 = scmp.eq.s32.totalorder %s27, 3
      %p97 = por %p95, %p96
      %p99 = scmp.ne.s32.totalorder %s82, %s98
      %p100 = scmp.eq.s32.totalorder %s27, 0
      %p101 = por %p99, %p100
      %s102 = ssub.s32 %s21, %s28
      %p103 = scmp.eq.s32.totalorder %s102, 0
      %s105 = sadd.s32 %s104, 1
      %s106 = scalar_select %p103, %s104, %s105
      %p109 = pneg %p103
      %p110 = scmp.eq.s32.totalorder %s21, 3
      %p111 = por %p109, %p110
      %p112 = scmp.ne.s32.totalorder %s104, %s107
      %p113 = scmp.eq.s32.totalorder %s21, 0
      %p114 = por %p112, %p113
      %p115 = scmp.ne.s32.totalorder %s104, %s107
      %p116 = scmp.eq.s32.totalorder %s26, 3
      %p117 = por %p115, %p116
      %p118 = scmp.ne.s32.totalorder %s107, %s108
      %p119 = scmp.eq.s32.totalorder %s26, 0
      %p120 = por %p118, %p119
      %p121 = scmp.ne.s32.totalorder %s107, %s108
      %p122 = scmp.eq.s32.totalorder %s27, 3
      %p123 = por %p121, %p122
      %p125 = scmp.ne.s32.totalorder %s108, %s124
      %p126 = scmp.eq.s32.totalorder %s27, 0
      %p127 = por %p125, %p126
      %s128 = ssub.s32 %s21, %s28
      %p129 = scmp.eq.s32.totalorder %s128, 0
      %s131 = sadd.s32 %s130, 1
      %s132 = scalar_select %p129, %s130, %s131
      %p135 = pneg %p129
      %p136 = scmp.eq.s32.totalorder %s21, 3
      %p137 = por %p135, %p136
      %p138 = scmp.ne.s32.totalorder %s130, %s133
      %p139 = scmp.eq.s32.totalorder %s21, 0
      %p140 = por %p138, %p139
      %p141 = scmp.ne.s32.totalorder %s130, %s133
      %p142 = scmp.eq.s32.totalorder %s26, 3
      %p143 = por %p141, %p142
      %p144 = scmp.ne.s32.totalorder %s133, %s134
      %p145 = scmp.eq.s32.totalorder %s26, 0
      %p146 = por %p144, %p145
      %p147 = scmp.ne.s32.totalorder %s133, %s134
      %p148 = scmp.eq.s32.totalorder %s27, 3
      %p149 = por %p147, %p148
      %p151 = scmp.ne.s32.totalorder %s134, %s150
      %p152 = scmp.eq.s32.totalorder %s27, 0
      %p153 = por %p151, %p152
      %s154 = ssub.s32 %s21, %s28
      %p155 = scmp.eq.s32.totalorder %s154, 0
      %s157 = sadd.s32 %s156, 1
      %s158 = scalar_select %p155, %s156, %s157
      %p161 = pneg %p155
      %p162 = scmp.eq.s32.totalorder %s21, 3
      %p163 = por %p161, %p162
      %p164 = scmp.ne.s32.totalorder %s156, %s159
      %p165 = scmp.eq.s32.totalorder %s21, 0
      %p166 = por %p164, %p165
      %p167 = scmp.ne.s32.totalorder %s156, %s159
      %p168 = scmp.eq.s32.totalorder %s26, 3
      %p169 = por %p167, %p168
      %p170 = scmp.ne.s32.totalorder %s159, %s160
      %p171 = scmp.eq.s32.totalorder %s26, 0
      %p172 = por %p170, %p171
      %p173 = scmp.ne.s32.totalorder %s159, %s160
      %p174 = scmp.eq.s32.totalorder %s27, 3
      %p175 = por %p173, %p174
      %p177 = scmp.ne.s32.totalorder %s160, %s176
      %p178 = scmp.eq.s32.totalorder %s27, 0
      %p179 = por %p177, %p178
      %s180 = ssub.s32 %s21, %s28
      %p181 = scmp.eq.s32.totalorder %s180, 0
      %s183 = sadd.s32 %s182, 1
      %s184 = scalar_select %p181, %s182, %s183
      %p187 = pneg %p181
      %p188 = scmp.eq.s32.totalorder %s21, 3
      %p189 = por %p187, %p188
      %p190 = scmp.ne.s32.totalorder %s182, %s185
      %p191 = scmp.eq.s32.totalorder %s21, 0
      %p192 = por %p190, %p191
      %p193 = scmp.ne.s32.totalorder %s182, %s185
      %p194 = scmp.eq.s32.totalorder %s26, 3
      %p195 = por %p193, %p194
      %p196 = scmp.ne.s32.totalorder %s185, %s186
      %p197 = scmp.eq.s32.totalorder %s26, 0
      %p198 = por %p196, %p197
      %p199 = scmp.ne.s32.totalorder %s185, %s186
      %p200 = scmp.eq.s32.totalorder %s27, 3
      %p201 = por %p199, %p200
      %p203 = scmp.ne.s32.totalorder %s186, %s202
      %p204 = scmp.eq.s32.totalorder %s27, 0
      %p205 = por %p203, %p204
      %s206 = ssub.s32 %s21, %s28
      %p207 = scmp.eq.s32.totalorder %s206, 0
      %s209 = sadd.s32 %s208, 1
      %s210 = scalar_select %p207, %s208, %s209
      %p213 = pneg %p207
      %p214 = scmp.eq.s32.totalorder %s21, 3
      %p215 = por %p213, %p214
      %p216 = scmp.ne.s32.totalorder %s208, %s211
      %p217 = scmp.eq.s32.totalorder %s21, 0
      %p218 = por %p216, %p217
      %p219 = scmp.ne.s32.totalorder %s208, %s211
      %p220 = scmp.eq.s32.totalorder %s26, 3
      %p221 = por %p219, %p220
      %p222 = scmp.ne.s32.totalorder %s211, %s212
      %p223 = scmp.eq.s32.totalorder %s26, 0
      %p224 = por %p222, %p223
      %p225 = scmp.ne.s32.totalorder %s211, %s212
      %p226 = scmp.eq.s32.totalorder %s27, 3
      %p227 = por %p225, %p226
      %p229 = scmp.ne.s32.totalorder %s212, %s228
      %p230 = scmp.eq.s32.totalorder %s27, 0
      %p231 = por %p229, %p230
      %s232 = ssub.s32 %s21, %s28
      %p233 = scmp.eq.s32.totalorder %s232, 0
      %s235 = sadd.s32 %s234, 1
      %s236 = scalar_select %p233, %s234, %s235
      %p239 = pneg %p233
      %p240 = scmp.eq.s32.totalorder %s21, 3
      %p241 = por %p239, %p240
      %p242 = scmp.ne.s32.totalorder %s234, %s237
      %p243 = scmp.eq.s32.totalorder %s21, 0
      %p244 = por %p242, %p243
      %p245 = scmp.ne.s32.totalorder %s234, %s237
      %p246 = scmp.eq.s32.totalorder %s26, 3
      %p247 = por %p245, %p246
      %p248 = scmp.ne.s32.totalorder %s237, %s238
      %p249 = scmp.eq.s32.totalorder %s26, 0
      %p250 = por %p248, %p249
      %p251 = scmp.ne.s32.totalorder %s237, %s238
      %p252 = scmp.eq.s32.totalorder %s27, 3
      %p253 = por %p251, %p252
      %p255 = scmp.ne.s32.totalorder %s238, %s254
      %p256 = scmp.eq.s32.totalorder %s27, 0
      %p257 = por %p255, %p256
      %s258 = ssub.s32 %s21, %s28
      %p259 = scmp.eq.s32.totalorder %s258, 0
      %s261 = sadd.s32 %s260, 1
      %s262 = scalar_select %p259, %s260, %s261
      %p265 = pneg %p259
      %p266 = scmp.eq.s32.totalorder %s21, 3
      %p267 = por %p265, %p266
      %p268 = scmp.ne.s32.totalorder %s260, %s263
      %p269 = scmp.eq.s32.totalorder %s21, 0
      %p270 = por %p268, %p269
      %p271 = scmp.ne.s32.totalorder %s260, %s263
      %p272 = scmp.eq.s32.totalorder %s26, 3
      %p273 = por %p271, %p272
      %p274 = scmp.ne.s32.totalorder %s263, %s264
      %p275 = scmp.eq.s32.totalorder %s26, 0
      %p276 = por %p274, %p275
      %p277 = scmp.ne.s32.totalorder %s263, %s264
      %p278 = scmp.eq.s32.totalorder %s27, 3
      %p279 = por %p277, %p278
      %p281 = scmp.ne.s32.totalorder %s264, %s280
      %p282 = scmp.eq.s32.totalorder %s27, 0
      %p283 = por %p281, %p282
      %s284 = ssub.s32 %s21, %s28
      %p285 = scmp.eq.s32.totalorder %s284, 0
      %s287 = sadd.s32 %s286, 1
      %s288 = scalar_select %p285, %s286, %s287
      %p291 = pneg %p285
      %p292 = scmp.eq.s32.totalorder %s21, 3
      %p293 = por %p291, %p292
      %p294 = scmp.ne.s32.totalorder %s286, %s289
      %p295 = scmp.eq.s32.totalorder %s21, 0
      %p296 = por %p294, %p295
      %p297 = scmp.ne.s32.totalorder %s286, %s289
      %p298 = scmp.eq.s32.totalorder %s26, 3
      %p299 = por %p297, %p298
      %p300 = scmp.ne.s32.totalorder %s289, %s290
      %p301 = scmp.eq.s32.totalorder %s26, 0
      %p302 = por %p300, %p301
      %p303 = scmp.ne.s32.totalorder %s289, %s290
      %p304 = scmp.eq.s32.totalorder %s27, 3
      %p305 = por %p303, %p304
      %p307 = scmp.ne.s32.totalorder %s290, %s306
      %p308 = scmp.eq.s32.totalorder %s27, 0
      %p309 = por %p307, %p308
      %s311 = sadd.s32 %s310, 1
      %p314 = scmp.eq.s32.totalorder %s21, 3
      %p315 = scmp.ne.s32.totalorder %s310, %s312
      %p316 = scmp.eq.s32.totalorder %s21, 0
      %p317 = por %p315, %p316
      %p318 = scmp.ne.s32.totalorder %s310, %s312
      %p319 = scmp.eq.s32.totalorder %s26, 3
      %p320 = por %p318, %p319
      %p321 = scmp.ne.s32.totalorder %s312, %s313
      %p322 = scmp.eq.s32.totalorder %s26, 0
      %p323 = por %p321, %p322
      %p324 = scmp.ne.s32.totalorder %s312, %s313
      %p325 = scmp.eq.s32.totalorder %s27, 3
      %p326 = por %p324, %p325
      %p328 = scmp.ne.s32.totalorder %s313, %s327
      %p329 = scmp.eq.s32.totalorder %s27, 0
      %p330 = por %p328, %p329
      %s332 = sadd.s32 %s331, 1
      %p335 = scmp.eq.s32.totalorder %s21, 3
      %p336 = scmp.ne.s32.totalorder %s331, %s333
      %p337 = scmp.eq.s32.totalorder %s21, 0
      %p338 = por %p336, %p337
      %p339 = scmp.ne.s32.totalorder %s331, %s333
      %p340 = scmp.eq.s32.totalorder %s26, 3
      %p341 = por %p339, %p340
      %p342 = scmp.ne.s32.totalorder %s333, %s334
      %p343 = scmp.eq.s32.totalorder %s26, 0
      %p344 = por %p342, %p343
      %p345 = scmp.ne.s32.totalorder %s333, %s334
      %p346 = scmp.eq.s32.totalorder %s27, 3
      %p347 = por %p345, %p346
      %p349 = scmp.ne.s32.totalorder %s334, %s348
      %p350 = scmp.eq.s32.totalorder %s27, 0
      %p351 = por %p349, %p350
      %s353 = sadd.s32 %s352, 1
      %p356 = scmp.eq.s32.totalorder %s21, 3
      %p357 = scmp.ne.s32.totalorder %s352, %s354
      %p358 = scmp.eq.s32.totalorder %s21, 0
      %p359 = por %p357, %p358
      %p360 = scmp.ne.s32.totalorder %s352, %s354
      %p361 = scmp.eq.s32.totalorder %s26, 3
      %p362 = por %p360, %p361
      %p363 = scmp.ne.s32.totalorder %s354, %s355
      %p364 = scmp.eq.s32.totalorder %s26, 0
      %p365 = por %p363, %p364
      %p366 = scmp.ne.s32.totalorder %s354, %s355
      %p367 = scmp.eq.s32.totalorder %s27, 3
      %p368 = por %p366, %p367
      %p370 = scmp.ne.s32.totalorder %s355, %s369
      %p371 = scmp.eq.s32.totalorder %s27, 0
      %p372 = por %p370, %p371
      %s374 = sadd.s32 %s373, 1
      %p377 = scmp.eq.s32.totalorder %s21, 3
      %p378 = scmp.ne.s32.totalorder %s373, %s375
      %p379 = scmp.eq.s32.totalorder %s21, 0
      %p380 = por %p378, %p379
      %p381 = scmp.ne.s32.totalorder %s373, %s375
      %p382 = scmp.eq.s32.totalorder %s26, 3
      %p383 = por %p381, %p382
      %p384 = scmp.ne.s32.totalorder %s375, %s376
      %p385 = scmp.eq.s32.totalorder %s26, 0
      %p386 = por %p384, %p385
      %p387 = scmp.ne.s32.totalorder %s375, %s376
      %p388 = scmp.eq.s32.totalorder %s27, 3
      %p389 = por %p387, %p388
      %p391 = scmp.ne.s32.totalorder %s376, %s390
      %p392 = scmp.eq.s32.totalorder %s27, 0
      %p393 = por %p391, %p392
      %p394 = scmp.le.s32.totalorder 1, %s21
      %p395 = scmp.lt.s32.totalorder %s21, 5
      %p396 = pnand %p394, %p395
      %p397 = pneg %p396
      // Predicated region
      $region9: #{tpu_custom_call.1} parent=5 // pred_check
        _
      $region10: #{tpu_custom_call.1} parent=5 // pred_check_branch
        %399 = sbr.rel (%p396) target = $region12
      $region11: #{tpu_custom_call.1} parent=5 // pred_region
        %s400 = ssub.s32 %s21, 1
        // Predicated region
        $region13: #{tpu_custom_call.1} parent=11 // pred_check
          %p401 = pneg %p42
        $region14: #{tpu_custom_call.1} parent=11 // pred_check_branch
          %403 = sbr.rel (%p401) target = $region16
        $region15: #{tpu_custom_call.1} parent=11 // pred_region
          _
        $region16: #{tpu_custom_call.1} parent=11 // pred_fallthru
          _
        // Predicated region
        $region17: #{tpu_custom_call.1} parent=11 // pred_check
          %p404 = pneg %p323
        $region18: #{tpu_custom_call.1} parent=11 // pred_check_branch
          %406 = sbr.rel (%p404) target = $region20
        $region19: #{tpu_custom_call.1} parent=11 // pred_region
          _
        $region20: #{tpu_custom_call.1} parent=11 // pred_fallthru
          _
        // Predicated region
        $region21: #{tpu_custom_call.1} parent=11 // pred_check
          %p407 = pneg %p344
        $region22: #{tpu_custom_call.1} parent=11 // pred_check_branch
          %409 = sbr.rel (%p407) target = $region24
        $region23: #{tpu_custom_call.1} parent=11 // pred_region
          _
        $region24: #{tpu_custom_call.1} parent=11 // pred_fallthru
          _
        // Predicated region
        $region25: #{tpu_custom_call.1} parent=11 // pred_check
          %p410 = pneg %p365
        $region26: #{tpu_custom_call.1} parent=11 // pred_check_branch
          %412 = sbr.rel (%p410) target = $region28
        $region27: #{tpu_custom_call.1} parent=11 // pred_region
          _
        $region28: #{tpu_custom_call.1} parent=11 // pred_fallthru
          _
      $region12: #{tpu_custom_call.1} parent=5 // pred_fallthru
        _
      %p413 = scmp.lt.s32.totalorder %s21, 4
      // Predicated region
      $region29: #{tpu_custom_call.1} parent=5 // pred_check
        %p414 = pneg %p413
      $region30: #{tpu_custom_call.1} parent=5 // pred_check_branch
        %416 = sbr.rel (%p414) target = $region32
      $region31: #{tpu_custom_call.1} parent=5 // pred_region
        // Predicated region
        $region33: #{tpu_custom_call.1} parent=31 // pred_check
          %p417 = pneg %p62
        $region34: #{tpu_custom_call.1} parent=31 // pred_check_branch
          %419 = sbr.rel (%p417) target = $region36
        $region35: #{tpu_custom_call.1} parent=31 // pred_region
          %p420 = scmp.lt.s32.totalorder %s21, 3
          %s421 = scalar_select %p420, %s21, 3
          %s422 = scalar_lea.vmem %s1, %s421
        $region36: #{tpu_custom_call.1} parent=31 // pred_fallthru
          _
        // Predicated region
        $region37: #{tpu_custom_call.1} parent=31 // pred_check
          %p423 = pneg %p88
        $region38: #{tpu_custom_call.1} parent=31 // pred_check_branch
          %425 = sbr.rel (%p423) target = $region40
        $region39: #{tpu_custom_call.1} parent=31 // pred_region
          %p426 = scmp.lt.s32.totalorder %s21, 3
          %s427 = scalar_select %p426, %s21, 3
          %s428 = scalar_lea.vmem %s2, %s427
        $region40: #{tpu_custom_call.1} parent=31 // pred_fallthru
          _
        // Predicated region
        $region41: #{tpu_custom_call.1} parent=31 // pred_check
          %p429 = pneg %p114
        $region42: #{tpu_custom_call.1} parent=31 // pred_check_branch
          %431 = sbr.rel (%p429) target = $region44
        $region43: #{tpu_custom_call.1} parent=31 // pred_region
          %p432 = scmp.lt.s32.totalorder %s21, 3
          %s433 = scalar_select %p432, %s21, 3
          %s434 = smul.addr %s433, 32
          %s435 = smul.addr %s434, 4
          %s436 = scalar_lea.vmem %s3, %s435
        $region44: #{tpu_custom_call.1} parent=31 // pred_fallthru
          _
        // Predicated region
        $region45: #{tpu_custom_call.1} parent=31 // pred_check
          %p437 = pneg %p140
        $region46: #{tpu_custom_call.1} parent=31 // pred_check_branch
          %439 = sbr.rel (%p437) target = $region48
        $region47: #{tpu_custom_call.1} parent=31 // pred_region
          %p440 = scmp.lt.s32.totalorder %s21, 3
          %s441 = scalar_select %p440, %s21, 3
          %s442 = smul.addr %s441, 32
          %s443 = smul.addr %s442, 4
          %s444 = scalar_lea.vmem %s4, %s443
        $region48: #{tpu_custom_call.1} parent=31 // pred_fallthru
          _
        // Predicated region
        $region49: #{tpu_custom_call.1} parent=31 // pred_check
          %p445 = pneg %p166
        $region50: #{tpu_custom_call.1} parent=31 // pred_check_branch
          %447 = sbr.rel (%p445) target = $region52
        $region51: #{tpu_custom_call.1} parent=31 // pred_region
          %p448 = scmp.lt.s32.totalorder %s21, 3
          %s449 = scalar_select %p448, %s21, 3
          %s450 = smul.addr %s449, 32
          %s451 = smul.addr %s450, 4
          %s452 = scalar_lea.vmem %s5, %s451
        $region52: #{tpu_custom_call.1} parent=31 // pred_fallthru
          _
        // Predicated region
        $region53: #{tpu_custom_call.1} parent=31 // pred_check
          %p453 = pneg %p192
        $region54: #{tpu_custom_call.1} parent=31 // pred_check_branch
          %455 = sbr.rel (%p453) target = $region56
        $region55: #{tpu_custom_call.1} parent=31 // pred_region
          %p456 = scmp.lt.s32.totalorder %s21, 3
          %s457 = scalar_select %p456, %s21, 3
          %s458 = smul.addr %s457, 8
          %s459 = smul.addr %s458, 4
          %s460 = scalar_lea.vmem %s6, %s459
        $region56: #{tpu_custom_call.1} parent=31 // pred_fallthru
          _
        // Predicated region
        $region57: #{tpu_custom_call.1} parent=31 // pred_check
          %p461 = pneg %p218
        $region58: #{tpu_custom_call.1} parent=31 // pred_check_branch
          %463 = sbr.rel (%p461) target = $region60
        $region59: #{tpu_custom_call.1} parent=31 // pred_region
          %p464 = scmp.lt.s32.totalorder %s21, 3
          %s465 = scalar_select %p464, %s21, 3
          %s466 = scalar_lea.vmem %s7, %s465
        $region60: #{tpu_custom_call.1} parent=31 // pred_fallthru
          _
        // Predicated region
        $region61: #{tpu_custom_call.1} parent=31 // pred_check
          %p467 = pneg %p244
        $region62: #{tpu_custom_call.1} parent=31 // pred_check_branch
          %469 = sbr.rel (%p467) target = $region64
        $region63: #{tpu_custom_call.1} parent=31 // pred_region
          %p470 = scmp.lt.s32.totalorder %s21, 3
          %s471 = scalar_select %p470, %s21, 3
          %s472 = scalar_lea.vmem %s8, %s471
        $region64: #{tpu_custom_call.1} parent=31 // pred_fallthru
          _
        // Predicated region
        $region65: #{tpu_custom_call.1} parent=31 // pred_check
          %p473 = pneg %p270
        $region66: #{tpu_custom_call.1} parent=31 // pred_check_branch
          %475 = sbr.rel (%p473) target = $region68
        $region67: #{tpu_custom_call.1} parent=31 // pred_region
          %p476 = scmp.lt.s32.totalorder %s21, 3
          %s477 = scalar_select %p476, %s21, 3
          %s478 = smul.addr %s477, 16
          %s479 = smul.addr %s478, 4
          %s480 = scalar_lea.vmem %s9, %s479
        $region68: #{tpu_custom_call.1} parent=31 // pred_fallthru
          _
        // Predicated region
        $region69: #{tpu_custom_call.1} parent=31 // pred_check
          %p481 = pneg %p296
        $region70: #{tpu_custom_call.1} parent=31 // pred_check_branch
          %483 = sbr.rel (%p481) target = $region72
        $region71: #{tpu_custom_call.1} parent=31 // pred_region
          %p484 = scmp.lt.s32.totalorder %s21, 3
          %s485 = scalar_select %p484, %s21, 3
          %s486 = smul.addr %s485, 32
          %s487 = smul.addr %s486, 4
          %s488 = scalar_lea.vmem %s10, %s487
        $region72: #{tpu_custom_call.1} parent=31 // pred_fallthru
          _
      $region32: #{tpu_custom_call.1} parent=5 // pred_fallthru
        _
      %p489 = scmp.le.s32.totalorder 1, %s21
      %p490 = scmp.lt.s32.totalorder %s21, 5
      %p491 = pnand %p489, %p490
      %p492 = pneg %p491
      // Predicated region
      $region73: #{tpu_custom_call.1} parent=5 // pred_check
        _
      $region74: #{tpu_custom_call.1} parent=5 // pred_check_branch
        %494 = sbr.rel (%p491) target = $region76
      $region75: #{tpu_custom_call.1} parent=5 // pred_region
        %s495 = ssub.s32 %s21, 1
        %p496 = pneg %p42
        %p497 = pneg %p39
        %p498 = scmp.lt.s32.totalorder %s26, 3
        %s499 = scalar_select %p498, %s26, 3
        %s500 = scalar_lea.vmem %s1, %s499
        %p501 = pneg %p68
        %p502 = pneg %p65
        %p503 = scmp.lt.s32.totalorder %s26, 3
        %s504 = scalar_select %p503, %s26, 3
        %s505 = scalar_lea.vmem %s2, %s504
        %p506 = pneg %p94
        %p507 = pneg %p91
        %p508 = scmp.lt.s32.totalorder %s26, 3
        %s509 = scalar_select %p508, %s26, 3
        %s510 = smul.addr %s509, 32
        %s511 = smul.addr %s510, 4
        %s512 = scalar_lea.vmem %s3, %s511
        %p513 = pneg %p120
        %p514 = pneg %p117
        %p515 = scmp.lt.s32.totalorder %s26, 3
        %s516 = scalar_select %p515, %s26, 3
        %s517 = smul.addr %s516, 32
        %s518 = smul.addr %s517, 4
        %s519 = scalar_lea.vmem %s4, %s518
        %p520 = pneg %p146
        %p521 = pneg %p143
        %p522 = scmp.lt.s32.totalorder %s26, 3
        %s523 = scalar_select %p522, %s26, 3
        %s524 = smul.addr %s523, 32
        %s525 = smul.addr %s524, 4
        %s526 = scalar_lea.vmem %s5, %s525
        %p527 = pneg %p172
        %p528 = pneg %p169
        %p529 = scmp.lt.s32.totalorder %s26, 3
        %s530 = scalar_select %p529, %s26, 3
        %s531 = smul.addr %s530, 8
        %s532 = smul.addr %s531, 4
        %s533 = scalar_lea.vmem %s6, %s532
        %p534 = pneg %p198
        %p535 = pneg %p195
        %p536 = scmp.lt.s32.totalorder %s26, 3
        %s537 = scalar_select %p536, %s26, 3
        %s538 = scalar_lea.vmem %s7, %s537
        %p539 = pneg %p224
        %p540 = pneg %p221
        %p541 = scmp.lt.s32.totalorder %s26, 3
        %s542 = scalar_select %p541, %s26, 3
        %s543 = scalar_lea.vmem %s8, %s542
        %p544 = pneg %p250
        %p545 = pneg %p247
        %p546 = scmp.lt.s32.totalorder %s26, 3
        %s547 = scalar_select %p546, %s26, 3
        %s548 = smul.addr %s547, 16
        %s549 = smul.addr %s548, 4
        %s550 = scalar_lea.vmem %s9, %s549
        %p551 = pneg %p276
        %p552 = pneg %p273
        %p553 = scmp.lt.s32.totalorder %s26, 3
        %s554 = scalar_select %p553, %s26, 3
        %s555 = smul.addr %s554, 32
        %s556 = smul.addr %s555, 4
        %s557 = scalar_lea.vmem %s10, %s556
        %p558 = pneg %p302
        %p559 = pneg %p299
        %p560 = pneg %p323
        %p561 = pneg %p320
        %p562 = pneg %p344
        %p563 = pneg %p341
        %p564 = pneg %p365
        %p565 = pneg %p362
        %p566 = pneg %p386
        %p567 = pneg %p383
        %p568 = scmp.lt.s32.totalorder %s26, 3
        %s569 = scalar_select %p568, %s26, 3
        %s570 = scalar_lea.vmem %s1, %s569
        %p571 = scmp.lt.s32.totalorder %s26, 3
        %s572 = scalar_select %p571, %s26, 3
        %s573 = scalar_lea.vmem %s2, %s572
        %p574 = scmp.lt.s32.totalorder %s26, 3
        %s575 = scalar_select %p574, %s26, 3
        %s576 = smul.addr %s575, 32
        %s577 = smul.addr %s576, 4
        %s578 = scalar_lea.vmem %s3, %s577
        %p579 = scmp.lt.s32.totalorder %s26, 3
        %s580 = scalar_select %p579, %s26, 3
        %s581 = smul.addr %s580, 32
        %s582 = smul.addr %s581, 4
        %s583 = scalar_lea.vmem %s4, %s582
        %p584 = scmp.lt.s32.totalorder %s26, 3
        %s585 = scalar_select %p584, %s26, 3
        %s586 = smul.addr %s585, 32
        %s587 = smul.addr %s586, 4
        %s588 = scalar_lea.vmem %s5, %s587
        %p589 = scmp.lt.s32.totalorder %s26, 3
        %s590 = scalar_select %p589, %s26, 3
        %s591 = smul.addr %s590, 8
        %s592 = smul.addr %s591, 4
        %s593 = scalar_lea.vmem %s6, %s592
        %p594 = scmp.lt.s32.totalorder %s26, 3
        %s595 = scalar_select %p594, %s26, 3
        %s596 = scalar_lea.vmem %s7, %s595
        %p597 = scmp.lt.s32.totalorder %s26, 3
        %s598 = scalar_select %p597, %s26, 3
        %s599 = scalar_lea.vmem %s8, %s598
        %p600 = scmp.lt.s32.totalorder %s26, 3
        %s601 = scalar_select %p600, %s26, 3
        %s602 = smul.addr %s601, 16
        %s603 = smul.addr %s602, 4
        %s604 = scalar_lea.vmem %s9, %s603
        %p605 = scmp.lt.s32.totalorder %s26, 3
        %s606 = scalar_select %p605, %s26, 3
        %s607 = smul.addr %s606, 32
        %s608 = smul.addr %s607, 4
        %s609 = scalar_lea.vmem %s10, %s608
        %p611 = scmp.eq.s32.totalorder %s26, 0
        // Predicated region
        $region77: #{tpu_custom_call.1} parent=75 // pred_check
          %p612 = pneg %p611
        $region78: #{tpu_custom_call.1} parent=75 // pred_check_branch
          %614 = sbr.rel (%p612) target = $region80
        $region79: #{tpu_custom_call.1} parent=75 // pred_region
          %v615 = vld [vmem:[%s0] sm:$0xff]
          %v616 = vld [vmem:[%s0 + $0x8] sm:$0xff]
          %vm617 = vcmask 523264
          %618 = vst.msk [vmem:[#allocation2] sm:$0xff] %vm617, %v615
          %619 = vst.msk [vmem:[#allocation2 + $0x8] sm:$0xff] %vm617, %v616
        $region80: #{tpu_custom_call.1} parent=75 // pred_fallthru
          _
        %v620 = vld [vmem:[#allocation2] sm:$0xff]
        %v621 = vld [vmem:[#allocation2 + $0x8] sm:$0xff]
        %v622 = vld [vmem:[%s570] sm:$0x1]
        %v623 = vld [vmem:[%s573] sm:$0x1]
        %vm624 = vcmask 523264
        %v625 = vsel %vm624, %v620, 0.0
        %626 = vadd.xlane.f32.xlu0 %v625
        %v627 = vpop.xlane.xlu0 %626
        %v628 = vsel %vm624, %v621, 0.0
        %629 = vadd.xlane.f32.xlu0 %v628
        %v630 = vpop.xlane.xlu0 %629
        %v631 = vrcp.pop 64.0
        %v632 = vmul.f32 64.0, %v631
        %v633 = vsub.f32 1.0, %v632
        %v634 = vmul.f32 %v631, %v633
        %v635 = vadd.f32 %v631, %v634
        %vm636 = vweird.f32 %v631
        %v637 = vsel %vm636, %v631, %v635
        %v638 = vmul.f32 %v627, %v637
        %v639 = vmul.f32 %v630, %v637
        %v640 = vsub.f32 %v620, %v638
        %v641 = vsub.f32 %v621, %v639
        %v642 = vmul.f32 %v640, %v640
        %v643 = vmul.f32 %v641, %v641
        %v644 = vsel %vm624, %v642, 0.0
        %645 = vadd.xlane.f32.xlu0 %v644
        %v646 = vpop.xlane.xlu0 %645
        %v647 = vsel %vm624, %v643, 0.0
        %648 = vadd.xlane.f32.xlu0 %v647
        %v649 = vpop.xlane.xlu0 %648
        %v650 = vmul.f32 %v646, %v637
        %v651 = vmul.f32 %v649, %v637
        %v652 = vadd.f32 %v650, 1e-05
        %v653 = vadd.f32 %v651, 1e-05
        %v654 = vrsqrt.pop %v652
        %v655 = vmul.f32 %v654, %v652
        %v656 = vmul.f32 %v655, %v654
        %v657 = vmul.f32 0.5, %v656
        %v658 = vsub.f32 1.5, %v657
        %v659 = vmul.f32 %v654, %v658
        %vm660 = vweird.f32 %v652
        %vm661 = vweird.f32 %v654
        %vm662 = vmor %vm660, %vm661
        %v663 = vsel %vm662, %v654, %v659
        %v664 = vrsqrt.pop %v653
        %v665 = vmul.f32 %v664, %v653
        %v666 = vmul.f32 %v665, %v664
        %v667 = vmul.f32 0.5, %v666
        %v668 = vsub.f32 1.5, %v667
        %v669 = vmul.f32 %v664, %v668
        %vm670 = vweird.f32 %v653
        %vm671 = vweird.f32 %v664
        %vm672 = vmor %vm670, %vm671
        %v673 = vsel %vm672, %v664, %v669
        %v674 = vmul.f32 %v640, %v663
        %v675 = vmul.f32 %v641, %v673
        %v677 = vperm.slane %v622, 0
        %v679 = vmul.f32 %v674, %v677
        %v680 = vmul.f32 %v675, %v677
        %v682 = vperm.slane %v623, 0
        %v684 = vadd.f32 %v679, %v682
        %v685 = vadd.f32 %v680, %v682
        %v686 = vpack.c.bf16 %v685, %v684
        %v687 = vlaneseq
        %v688 = vshrl.u32 %v687, 7
        %v689 = vlaneseq
        %v690 = vand.u32 %v689, 127
        %vm691 = vcmp.ge.s32.totalorder %v688, %v690
        %v692 = vld [vmem:[%s578] sm:$0xf]
        %v693 = vld [vmem:[%s578 + $0x4] sm:$0xf]
        %v694 = vld [vmem:[%s578 + $0x8] sm:$0xf]
        %v695 = vld [vmem:[%s578 + $0xc] sm:$0xf]
        %v696 = vld [vmem:[%s578 + $0x10] sm:$0xf]
        %v697 = vld [vmem:[%s578 + $0x14] sm:$0xf]
        %v698 = vld [vmem:[%s578 + $0x18] sm:$0xf]
        %v699 = vld [vmem:[%s578 + $0x1c] sm:$0xf]
        %v708 = vunpack.c.l.b16 %v692
        %v709 = vunpack.c.l.b16 %v693
        %v710 = vunpack.c.l.b16 %v694
        %v711 = vunpack.c.l.b16 %v695
        %v712 = vunpack.c.l.b16 %v696
        %v713 = vunpack.c.l.b16 %v697
        %v714 = vunpack.c.l.b16 %v698
        %v715 = vunpack.c.l.b16 %v699
        %v716 = vpack.c.b16 %v709, %v708
        %v717 = vpack.c.b16 %v711, %v710
        %v718 = vpack.c.b16 %v713, %v712
        %v719 = vpack.c.b16 %v715, %v714
        %v725 = vsel %vm624, %v686, 0
        %727 = vmatpush.bf16.msra.mxu0 0
        %728 = vmatpush.bf16.msra.mxu0 0
        %729 = vmatpush.bf16.msra.mxu0 0
        %730 = vmatpush.bf16.msra.mxu0 0
        %731 = vmatpush.bf16.msra.mxu0 %v719
        %732 = vmatpush.bf16.msra.mxu0 %v718
        %733 = vmatpush.bf16.msra.mxu0 %v717
        %734 = vmatpush.bf16.msra.mxu0 %v716
        %735 = vmatmul.bf16.gmra.mxu0 %v725
        %v736 = vpop.f32.mrf.mxu0
        %v737 = vadd.f32 0.0, %v736
        %v738 = vpop.f32.mrf.mxu0
        %v739 = vadd.f32 0.0, %v738
        %740 = vdwg.mxu0
        %v741 = vld [vmem:[%s583] sm:$0xf]
        %v742 = vld [vmem:[%s583 + $0x4] sm:$0xf]
        %v743 = vld [vmem:[%s583 + $0x8] sm:$0xf]
        %v744 = vld [vmem:[%s583 + $0xc] sm:$0xf]
        %v745 = vld [vmem:[%s583 + $0x10] sm:$0xf]
        %v746 = vld [vmem:[%s583 + $0x14] sm:$0xf]
        %v747 = vld [vmem:[%s583 + $0x18] sm:$0xf]
        %v748 = vld [vmem:[%s583 + $0x1c] sm:$0xf]
        %v757 = vunpack.c.l.b16 %v741
        %v758 = vunpack.c.l.b16 %v742
        %v759 = vunpack.c.l.b16 %v743
        %v760 = vunpack.c.l.b16 %v744
        %v761 = vunpack.c.l.b16 %v745
        %v762 = vunpack.c.l.b16 %v746
        %v763 = vunpack.c.l.b16 %v747
        %v764 = vunpack.c.l.b16 %v748
        %v765 = vpack.c.b16 %v758, %v757
        %v766 = vpack.c.b16 %v760, %v759
        %v767 = vpack.c.b16 %v762, %v761
        %v768 = vpack.c.b16 %v764, %v763
        %773 = vmatpush.bf16.msra.mxu0 0
        %774 = vmatpush.bf16.msra.mxu0 0
        %775 = vmatpush.bf16.msra.mxu0 0
        %776 = vmatpush.bf16.msra.mxu0 0
        %777 = vmatpush.bf16.msra.mxu0 %v768
        %778 = vmatpush.bf16.msra.mxu0 %v767
        %779 = vmatpush.bf16.msra.mxu0 %v766
        %780 = vmatpush.bf16.msra.mxu0 %v765
        %781 = vmatmul.bf16.gmra.mxu0 %v725
        %v782 = vpop.f32.mrf.mxu0
        %v783 = vadd.f32 0.0, %v782
        %v784 = vpop.f32.mrf.mxu0
        %v785 = vadd.f32 0.0, %v784
        %786 = vdwg.mxu0
        %v787 = vld [vmem:[%s588] sm:$0xf]
        %v788 = vld [vmem:[%s588 + $0x4] sm:$0xf]
        %v789 = vld [vmem:[%s588 + $0x8] sm:$0xf]
        %v790 = vld [vmem:[%s588 + $0xc] sm:$0xf]
        %v791 = vld [vmem:[%s588 + $0x10] sm:$0xf]
        %v792 = vld [vmem:[%s588 + $0x14] sm:$0xf]
        %v793 = vld [vmem:[%s588 + $0x18] sm:$0xf]
        %v794 = vld [vmem:[%s588 + $0x1c] sm:$0xf]
        %v803 = vunpack.c.l.b16 %v787
        %v804 = vunpack.c.l.b16 %v788
        %v805 = vunpack.c.l.b16 %v789
        %v806 = vunpack.c.l.b16 %v790
        %v807 = vunpack.c.l.b16 %v791
        %v808 = vunpack.c.l.b16 %v792
        %v809 = vunpack.c.l.b16 %v793
        %v810 = vunpack.c.l.b16 %v794
        %v811 = vpack.c.b16 %v804, %v803
        %v812 = vpack.c.b16 %v806, %v805
        %v813 = vpack.c.b16 %v808, %v807
        %v814 = vpack.c.b16 %v810, %v809
        %819 = vmatpush.bf16.msra.mxu0 0
        %820 = vmatpush.bf16.msra.mxu0 0
        %821 = vmatpush.bf16.msra.mxu0 0
        %822 = vmatpush.bf16.msra.mxu0 0
        %823 = vmatpush.bf16.msra.mxu0 %v814
        %824 = vmatpush.bf16.msra.mxu0 %v813
        %825 = vmatpush.bf16.msra.mxu0 %v812
        %826 = vmatpush.bf16.msra.mxu0 %v811
        %827 = vmatmul.bf16.gmra.mxu0 %v725
        %v828 = vpop.f32.mrf.mxu0
        %v829 = vadd.f32 0.0, %v828
        %v830 = vpop.f32.mrf.mxu0
        %v831 = vadd.f32 0.0, %v830
        %832 = vdwg.mxu0
        %vm833 = vcmask 130048
        %v835 = vsel %vm833, %v737, 0
        %v838 = vsel %vm833, %v783, 0
        %840 = vmatpush.xpose.msra.mxu0 0.0
        %841 = vmatpush.xpose.msra.mxu0 0.0
        %842 = vmatpush.xpose.msra.mxu0 0.0
        %843 = vmatpush.xpose.msra.mxu0 0.0
        %844 = vmatpush.xpose.msra.mxu0 0.0
        %845 = vmatpush.xpose.msra.mxu0 0.0
        %846 = vmatpush.xpose.msra.mxu0 0.0
        %847 = vmatpush.xpose.msra.mxu0 0.0
        %848 = vmatpush.xpose.msra.mxu0 0.0
        %849 = vmatpush.xpose.msra.mxu0 0.0
        %850 = vmatpush.xpose.msra.mxu0 0.0
        %851 = vmatpush.xpose.msra.mxu0 0.0
        %852 = vmatpush.xpose.msra.mxu0 0.0
        %853 = vmatpush.xpose.msra.mxu0 0.0
        %854 = vmatpush.xpose.msra.mxu0 0.0
        %855 = vmatpush.xpose.msra.mxu0 %v838
        %856 = vmatmul.f32.gmra.mxu0 %v835
        %v857 = vpop.f32.mrf.mxu0
        %v858 = vadd.f32 0.0, %v857
        %859 = vdwg.mxu0
        %v861 = vsel %vm833, %v739, 0
        %v864 = vsel %vm833, %v785, 0
        %866 = vmatpush.xpose.msra.mxu0 0.0
        %867 = vmatpush.xpose.msra.mxu0 0.0
        %868 = vmatpush.xpose.msra.mxu0 0.0
        %869 = vmatpush.xpose.msra.mxu0 0.0
        %870 = vmatpush.xpose.msra.mxu0 0.0
        %871 = vmatpush.xpose.msra.mxu0 0.0
        %872 = vmatpush.xpose.msra.mxu0 0.0
        %873 = vmatpush.xpose.msra.mxu0 0.0
        %874 = vmatpush.xpose.msra.mxu0 0.0
        %875 = vmatpush.xpose.msra.mxu0 0.0
        %876 = vmatpush.xpose.msra.mxu0 0.0
        %877 = vmatpush.xpose.msra.mxu0 0.0
        %878 = vmatpush.xpose.msra.mxu0 0.0
        %879 = vmatpush.xpose.msra.mxu0 0.0
        %880 = vmatpush.xpose.msra.mxu0 0.0
        %881 = vmatpush.xpose.msra.mxu0 %v864
        %882 = vmatmul.f32.gmra.mxu0 %v861
        %v883 = vpop.f32.mrf.mxu0
        %v884 = vadd.f32 0.0, %v883
        %885 = vdwg.mxu0
        %v886 = vmul.f32 %v858, 0.25
        %v887 = vmul.f32 %v884, 0.25
        %v888 = vsel %vm691, 1, 0
        %vm889 = vcmp.eq.s32.totalorder %v888, 1
        %v890 = vsel %vm889, %v886, -1e+30
        %v891 = vsel %vm889, %v887, -1e+30
        %vm892 = vcmask 64512
        %v893 = vsel %vm892, %v890, -inf
        %894 = vmax.xlane.f32.xlu0 %v893
        %v895 = vpop.xlane.xlu0 %894
        %v896 = vsel %vm892, %v891, -inf
        %897 = vmax.xlane.f32.xlu0 %v896
        %v898 = vpop.xlane.xlu0 %897
        %v899 = vsub.f32 %v890, %v895
        %v900 = vsub.f32 %v891, %v898
        %v901 = vmul.f32 %v899, 1.442695
        %v902 = vpow.pop %v901
        %v903 = vmul.f32 %v900, 1.442695
        %v904 = vpow.pop %v903
        %v905 = vsel %vm892, %v902, 0.0
        %906 = vadd.xlane.f32.xlu0 %v905
        %v907 = vpop.xlane.xlu0 %906
        %v908 = vsel %vm892, %v904, 0.0
        %909 = vadd.xlane.f32.xlu0 %v908
        %v910 = vpop.xlane.xlu0 %909
        %v911 = vrcp.pop %v907
        %v912 = vmul.f32 %v907, %v911
        %v913 = vsub.f32 1.0, %v912
        %v914 = vmul.f32 %v911, %v913
        %v915 = vadd.f32 %v911, %v914
        %vm916 = vweird.f32 %v907
        %vm917 = vweird.f32 %v911
        %vm918 = vmor %vm916, %vm917
        %v919 = vsel %vm918, %v911, %v915
        %v920 = vand.u32 2147483647, %v907
        %vm921 = vcmp.eq.f32.partialorder %v920, 8.507059e+37
        %v922 = vand.u32 %v907, 2147483648
        %v923 = vor.u32 1.1754944e-38, %v922
        %v924 = vsel %vm921, %v923, %v919
        %v925 = vmul.f32 %v902, %v924
        %v926 = vrcp.pop %v910
        %v927 = vmul.f32 %v910, %v926
        %v928 = vsub.f32 1.0, %v927
        %v929 = vmul.f32 %v926, %v928
        %v930 = vadd.f32 %v926, %v929
        %vm931 = vweird.f32 %v910
        %vm932 = vweird.f32 %v926
        %vm933 = vmor %vm931, %vm932
        %v934 = vsel %vm933, %v926, %v930
        %v935 = vand.u32 2147483647, %v910
        %vm936 = vcmp.eq.f32.partialorder %v935, 8.507059e+37
        %v937 = vand.u32 %v910, 2147483648
        %v938 = vor.u32 1.1754944e-38, %v937
        %v939 = vsel %vm936, %v938, %v934
        %v940 = vmul.f32 %v904, %v939
        %v942 = vsel %vm892, %v925, 0
        %944 = vmatpush.msra.mxu0 0.0
        %945 = vmatpush.msra.mxu0 0.0
        %946 = vmatpush.msra.mxu0 0.0
        %947 = vmatpush.msra.mxu0 0.0
        %948 = vmatpush.msra.mxu0 0.0
        %949 = vmatpush.msra.mxu0 0.0
        %950 = vmatpush.msra.mxu0 0.0
        %951 = vmatpush.msra.mxu0 0.0
        %952 = vmatpush.msra.mxu0 0.0
        %953 = vmatpush.msra.mxu0 0.0
        %954 = vmatpush.msra.mxu0 0.0
        %955 = vmatpush.msra.mxu0 0.0
        %956 = vmatpush.msra.mxu0 0.0
        %957 = vmatpush.msra.mxu0 0.0
        %958 = vmatpush.msra.mxu0 0.0
        %959 = vmatpush.msra.mxu0 %v829
        %960 = vmatmul.f32.gmra.mxu0 %v942
        %v961 = vpop.f32.mrf.mxu0
        %v962 = vadd.f32 0.0, %v961
        %963 = vdwg.mxu0
        %v965 = vsel %vm892, %v940, 0
        %967 = vmatpush.msra.mxu0 0.0
        %968 = vmatpush.msra.mxu0 0.0
        %969 = vmatpush.msra.mxu0 0.0
        %970 = vmatpush.msra.mxu0 0.0
        %971 = vmatpush.msra.mxu0 0.0
        %972 = vmatpush.msra.mxu0 0.0
        %973 = vmatpush.msra.mxu0 0.0
        %974 = vmatpush.msra.mxu0 0.0
        %975 = vmatpush.msra.mxu0 0.0
        %976 = vmatpush.msra.mxu0 0.0
        %977 = vmatpush.msra.mxu0 0.0
        %978 = vmatpush.msra.mxu0 0.0
        %979 = vmatpush.msra.mxu0 0.0
        %980 = vmatpush.msra.mxu0 0.0
        %981 = vmatpush.msra.mxu0 0.0
        %982 = vmatpush.msra.mxu0 %v831
        %983 = vmatmul.f32.gmra.mxu0 %v965
        %v984 = vpop.f32.mrf.mxu0
        %v985 = vadd.f32 0.0, %v984
        %986 = vdwg.mxu0
        %v987 = vpack.c.bf16 %v985, %v962
        %v988 = vld [vmem:[%s593] sm:$0xf]
        %v989 = vld [vmem:[%s593 + $0x4] sm:$0xf]
        %s990 = scalar_lea.vmem %s578, 32
        %v991 = vld [vmem:[%s990] sm:$0xf]
        %v992 = vld [vmem:[%s990 + $0x4] sm:$0xf]
        %v993 = vld [vmem:[%s990 + $0x8] sm:$0xf]
        %v994 = vld [vmem:[%s990 + $0xc] sm:$0xf]
        %v995 = vld [vmem:[%s990 + $0x10] sm:$0xf]
        %v996 = vld [vmem:[%s990 + $0x14] sm:$0xf]
        %v997 = vld [vmem:[%s990 + $0x18] sm:$0xf]
        %v998 = vld [vmem:[%s990 + $0x1c] sm:$0xf]
        %v1007 = vunpack.c.l.b16 %v991
        %v1008 = vunpack.c.l.b16 %v992
        %v1009 = vunpack.c.l.b16 %v993
        %v1010 = vunpack.c.l.b16 %v994
        %v1011 = vunpack.c.l.b16 %v995
        %v1012 = vunpack.c.l.b16 %v996
        %v1013 = vunpack.c.l.b16 %v997
        %v1014 = vunpack.c.l.b16 %v998
        %v1015 = vpack.c.b16 %v1008, %v1007
        %v1016 = vpack.c.b16 %v1010, %v1009
        %v1017 = vpack.c.b16 %v1012, %v1011
        %v1018 = vpack.c.b16 %v1014, %v1013
        %1023 = vmatpush.bf16.msra.mxu0 0
        %1024 = vmatpush.bf16.msra.mxu0 0
        %1025 = vmatpush.bf16.msra.mxu0 0
        %1026 = vmatpush.bf16.msra.mxu0 0
        %1027 = vmatpush.bf16.msra.mxu0 %v1018
        %1028 = vmatpush.bf16.msra.mxu0 %v1017
        %1029 = vmatpush.bf16.msra.mxu0 %v1016
        %1030 = vmatpush.bf16.msra.mxu0 %v1015
        %1031 = vmatmul.bf16.gmra.mxu0 %v725
        %v1032 = vpop.f32.mrf.mxu0
        %v1033 = vadd.f32 0.0, %v1032
        %v1034 = vpop.f32.mrf.mxu0
        %v1035 = vadd.f32 0.0, %v1034
        %1036 = vdwg.mxu0
        %s1037 = scalar_lea.vmem %s583, 32
        %v1038 = vld [vmem:[%s1037] sm:$0xf]
        %v1039 = vld [vmem:[%s1037 + $0x4] sm:$0xf]
        %v1040 = vld [vmem:[%s1037 + $0x8] sm:$0xf]
        %v1041 = vld [vmem:[%s1037 + $0xc] sm:$0xf]
        %v1042 = vld [vmem:[%s1037 + $0x10] sm:$0xf]
        %v1043 = vld [vmem:[%s1037 + $0x14] sm:$0xf]
        %v1044 = vld [vmem:[%s1037 + $0x18] sm:$0xf]
        %v1045 = vld [vmem:[%s1037 + $0x1c] sm:$0xf]
        %v1054 = vunpack.c.l.b16 %v1038
        %v1055 = vunpack.c.l.b16 %v1039
        %v1056 = vunpack.c.l.b16 %v1040
        %v1057 = vunpack.c.l.b16 %v1041
        %v1058 = vunpack.c.l.b16 %v1042
        %v1059 = vunpack.c.l.b16 %v1043
        %v1060 = vunpack.c.l.b16 %v1044
        %v1061 = vunpack.c.l.b16 %v1045
        %v1062 = vpack.c.b16 %v1055, %v1054
        %v1063 = vpack.c.b16 %v1057, %v1056
        %v1064 = vpack.c.b16 %v1059, %v1058
        %v1065 = vpack.c.b16 %v1061, %v1060
        %1070 = vmatpush.bf16.msra.mxu0 0
        %1071 = vmatpush.bf16.msra.mxu0 0
        %1072 = vmatpush.bf16.msra.mxu0 0
        %1073 = vmatpush.bf16.msra.mxu0 0
        %1074 = vmatpush.bf16.msra.mxu0 %v1065
        %1075 = vmatpush.bf16.msra.mxu0 %v1064
        %1076 = vmatpush.bf16.msra.mxu0 %v1063
        %1077 = vmatpush.bf16.msra.mxu0 %v1062
        %1078 = vmatmul.bf16.gmra.mxu0 %v725
        %v1079 = vpop.f32.mrf.mxu0
        %v1080 = vadd.f32 0.0, %v1079
        %v1081 = vpop.f32.mrf.mxu0
        %v1082 = vadd.f32 0.0, %v1081
        %1083 = vdwg.mxu0
        %s1084 = scalar_lea.vmem %s588, 32
        %v1085 = vld [vmem:[%s1084] sm:$0xf]
        %v1086 = vld [vmem:[%s1084 + $0x4] sm:$0xf]
        %v1087 = vld [vmem:[%s1084 + $0x8] sm:$0xf]
        %v1088 = vld [vmem:[%s1084 + $0xc] sm:$0xf]
        %v1089 = vld [vmem:[%s1084 + $0x10] sm:$0xf]
        %v1090 = vld [vmem:[%s1084 + $0x14] sm:$0xf]
        %v1091 = vld [vmem:[%s1084 + $0x18] sm:$0xf]
        %v1092 = vld [vmem:[%s1084 + $0x1c] sm:$0xf]
        %v1101 = vunpack.c.l.b16 %v1085
        %v1102 = vunpack.c.l.b16 %v1086
        %v1103 = vunpack.c.l.b16 %v1087
        %v1104 = vunpack.c.l.b16 %v1088
        %v1105 = vunpack.c.l.b16 %v1089
        %v1106 = vunpack.c.l.b16 %v1090
        %v1107 = vunpack.c.l.b16 %v1091
        %v1108 = vunpack.c.l.b16 %v1092
        %v1109 = vpack.c.b16 %v1102, %v1101
        %v1110 = vpack.c.b16 %v1104, %v1103
        %v1111 = vpack.c.b16 %v1106, %v1105
        %v1112 = vpack.c.b16 %v1108, %v1107
        %1117 = vmatpush.bf16.msra.mxu0 0
        %1118 = vmatpush.bf16.msra.mxu0 0
        %1119 = vmatpush.bf16.msra.mxu0 0
        %1120 = vmatpush.bf16.msra.mxu0 0
        %1121 = vmatpush.bf16.msra.mxu0 %v1112
        %1122 = vmatpush.bf16.msra.mxu0 %v1111
        %1123 = vmatpush.bf16.msra.mxu0 %v1110
        %1124 = vmatpush.bf16.msra.mxu0 %v1109
        %1125 = vmatmul.bf16.gmra.mxu0 %v725
        %v1126 = vpop.f32.mrf.mxu0
        %v1127 = vadd.f32 0.0, %v1126
        %v1128 = vpop.f32.mrf.mxu0
        %v1129 = vadd.f32 0.0, %v1128
        %1130 = vdwg.mxu0
        %v1132 = vsel %vm833, %v1033, 0
        %v1135 = vsel %vm833, %v1080, 0
        %1137 = vmatpush.xpose.msra.mxu0 0.0
        %1138 = vmatpush.xpose.msra.mxu0 0.0
        %1139 = vmatpush.xpose.msra.mxu0 0.0
        %1140 = vmatpush.xpose.msra.mxu0 0.0
        %1141 = vmatpush.xpose.msra.mxu0 0.0
        %1142 = vmatpush.xpose.msra.mxu0 0.0
        %1143 = vmatpush.xpose.msra.mxu0 0.0
        %1144 = vmatpush.xpose.msra.mxu0 0.0
        %1145 = vmatpush.xpose.msra.mxu0 0.0
        %1146 = vmatpush.xpose.msra.mxu0 0.0
        %1147 = vmatpush.xpose.msra.mxu0 0.0
        %1148 = vmatpush.xpose.msra.mxu0 0.0
        %1149 = vmatpush.xpose.msra.mxu0 0.0
        %1150 = vmatpush.xpose.msra.mxu0 0.0
        %1151 = vmatpush.xpose.msra.mxu0 0.0
        %1152 = vmatpush.xpose.msra.mxu0 %v1135
        %1153 = vmatmul.f32.gmra.mxu0 %v1132
        %v1154 = vpop.f32.mrf.mxu0
        %v1155 = vadd.f32 0.0, %v1154
        %1156 = vdwg.mxu0
        %v1158 = vsel %vm833, %v1035, 0
        %v1161 = vsel %vm833, %v1082, 0
        %1163 = vmatpush.xpose.msra.mxu0 0.0
        %1164 = vmatpush.xpose.msra.mxu0 0.0
        %1165 = vmatpush.xpose.msra.mxu0 0.0
        %1166 = vmatpush.xpose.msra.mxu0 0.0
        %1167 = vmatpush.xpose.msra.mxu0 0.0
        %1168 = vmatpush.xpose.msra.mxu0 0.0
        %1169 = vmatpush.xpose.msra.mxu0 0.0
        %1170 = vmatpush.xpose.msra.mxu0 0.0
        %1171 = vmatpush.xpose.msra.mxu0 0.0
        %1172 = vmatpush.xpose.msra.mxu0 0.0
        %1173 = vmatpush.xpose.msra.mxu0 0.0
        %1174 = vmatpush.xpose.msra.mxu0 0.0
        %1175 = vmatpush.xpose.msra.mxu0 0.0
        %1176 = vmatpush.xpose.msra.mxu0 0.0
        %1177 = vmatpush.xpose.msra.mxu0 0.0
        %1178 = vmatpush.xpose.msra.mxu0 %v1161
        %1179 = vmatmul.f32.gmra.mxu0 %v1158
        %v1180 = vpop.f32.mrf.mxu0
        %v1181 = vadd.f32 0.0, %v1180
        %1182 = vdwg.mxu0
        %v1183 = vmul.f32 %v1155, 0.25
        %v1184 = vmul.f32 %v1181, 0.25
        %v1185 = vsel %vm889, %v1183, -1e+30
        %v1186 = vsel %vm889, %v1184, -1e+30
        %v1187 = vsel %vm892, %v1185, -inf
        %1188 = vmax.xlane.f32.xlu0 %v1187
        %v1189 = vpop.xlane.xlu0 %1188
        %v1190 = vsel %vm892, %v1186, -inf
        %1191 = vmax.xlane.f32.xlu0 %v1190
        %v1192 = vpop.xlane.xlu0 %1191
        %v1193 = vsub.f32 %v1185, %v1189
        %v1194 = vsub.f32 %v1186, %v1192
        %v1195 = vmul.f32 %v1193, 1.442695
        %v1196 = vpow.pop %v1195
        %v1197 = vmul.f32 %v1194, 1.442695
        %v1198 = vpow.pop %v1197
        %v1199 = vsel %vm892, %v1196, 0.0
        %1200 = vadd.xlane.f32.xlu0 %v1199
        %v1201 = vpop.xlane.xlu0 %1200
        %v1202 = vsel %vm892, %v1198, 0.0
        %1203 = vadd.xlane.f32.xlu0 %v1202
        %v1204 = vpop.xlane.xlu0 %1203
        %v1205 = vrcp.pop %v1201
        %v1206 = vmul.f32 %v1201, %v1205
        %v1207 = vsub.f32 1.0, %v1206
        %v1208 = vmul.f32 %v1205, %v1207
        %v1209 = vadd.f32 %v1205, %v1208
        %vm1210 = vweird.f32 %v1201
        %vm1211 = vweird.f32 %v1205
        %vm1212 = vmor %vm1210, %vm1211
        %v1213 = vsel %vm1212, %v1205, %v1209
        %v1214 = vand.u32 2147483647, %v1201
        %vm1215 = vcmp.eq.f32.partialorder %v1214, 8.507059e+37
        %v1216 = vand.u32 %v1201, 2147483648
        %v1217 = vor.u32 1.1754944e-38, %v1216
        %v1218 = vsel %vm1215, %v1217, %v1213
        %v1219 = vmul.f32 %v1196, %v1218
        %v1220 = vrcp.pop %v1204
        %v1221 = vmul.f32 %v1204, %v1220
        %v1222 = vsub.f32 1.0, %v1221
        %v1223 = vmul.f32 %v1220, %v1222
        %v1224 = vadd.f32 %v1220, %v1223
        %vm1225 = vweird.f32 %v1204
        %vm1226 = vweird.f32 %v1220
        %vm1227 = vmor %vm1225, %vm1226
        %v1228 = vsel %vm1227, %v1220, %v1224
        %v1229 = vand.u32 2147483647, %v1204
        %vm1230 = vcmp.eq.f32.partialorder %v1229, 8.507059e+37
        %v1231 = vand.u32 %v1204, 2147483648
        %v1232 = vor.u32 1.1754944e-38, %v1231
        %v1233 = vsel %vm1230, %v1232, %v1228
        %v1234 = vmul.f32 %v1198, %v1233
        %v1236 = vsel %vm892, %v1219, 0
        %1238 = vmatpush.msra.mxu0 0.0
        %1239 = vmatpush.msra.mxu0 0.0
        %1240 = vmatpush.msra.mxu0 0.0
        %1241 = vmatpush.msra.mxu0 0.0
        %1242 = vmatpush.msra.mxu0 0.0
        %1243 = vmatpush.msra.mxu0 0.0
        %1244 = vmatpush.msra.mxu0 0.0
        %1245 = vmatpush.msra.mxu0 0.0
        %1246 = vmatpush.msra.mxu0 0.0
        %1247 = vmatpush.msra.mxu0 0.0
        %1248 = vmatpush.msra.mxu0 0.0
        %1249 = vmatpush.msra.mxu0 0.0
        %1250 = vmatpush.msra.mxu0 0.0
        %1251 = vmatpush.msra.mxu0 0.0
        %1252 = vmatpush.msra.mxu0 0.0
        %1253 = vmatpush.msra.mxu0 %v1127
        %1254 = vmatmul.f32.gmra.mxu0 %v1236
        %v1255 = vpop.f32.mrf.mxu0
        %v1256 = vadd.f32 0.0, %v1255
        %1257 = vdwg.mxu0
        %v1259 = vsel %vm892, %v1234, 0
        %1261 = vmatpush.msra.mxu0 0.0
        %1262 = vmatpush.msra.mxu0 0.0
        %1263 = vmatpush.msra.mxu0 0.0
        %1264 = vmatpush.msra.mxu0 0.0
        %1265 = vmatpush.msra.mxu0 0.0
        %1266 = vmatpush.msra.mxu0 0.0
        %1267 = vmatpush.msra.mxu0 0.0
        %1268 = vmatpush.msra.mxu0 0.0
        %1269 = vmatpush.msra.mxu0 0.0
        %1270 = vmatpush.msra.mxu0 0.0
        %1271 = vmatpush.msra.mxu0 0.0
        %1272 = vmatpush.msra.mxu0 0.0
        %1273 = vmatpush.msra.mxu0 0.0
        %1274 = vmatpush.msra.mxu0 0.0
        %1275 = vmatpush.msra.mxu0 0.0
        %1276 = vmatpush.msra.mxu0 %v1129
        %1277 = vmatmul.f32.gmra.mxu0 %v1259
        %v1278 = vpop.f32.mrf.mxu0
        %v1279 = vadd.f32 0.0, %v1278
        %1280 = vdwg.mxu0
        %v1281 = vpack.c.bf16 %v1279, %v1256
        %s1282 = scalar_lea.vmem %s593, 8
        %v1283 = vld [vmem:[%s1282] sm:$0xf]
        %v1284 = vld [vmem:[%s1282 + $0x4] sm:$0xf]
        %v1287 = vunpack.c.l.b16 %v1283
        %v1288 = vunpack.c.l.b16 %v1284
        %v1289 = vpack.c.b16 %v1288, %v1287
        %v1292 = vsel %vm833, %v1281, 0
        %1294 = vmatpush.bf16.msra.mxu0 0
        %1295 = vmatpush.bf16.msra.mxu0 0
        %1296 = vmatpush.bf16.msra.mxu0 0
        %1297 = vmatpush.bf16.msra.mxu0 0
        %1298 = vmatpush.bf16.msra.mxu0 0
        %1299 = vmatpush.bf16.msra.mxu0 0
        %1300 = vmatpush.bf16.msra.mxu0 0
        %1301 = vmatpush.bf16.msra.mxu0 %v1289
        %1302 = vmatmul.bf16.gmra.mxu0 %v1292
        %v1303 = vpop.f32.mrf.mxu0
        %v1304 = vadd.f32 0.0, %v1303
        %v1305 = vpop.f32.mrf.mxu0
        %v1306 = vadd.f32 0.0, %v1305
        %1307 = vdwg.mxu0
        %v1310 = vunpack.c.l.b16 %v988
        %v1311 = vunpack.c.l.b16 %v989
        %v1312 = vpack.c.b16 %v1311, %v1310
        %v1315 = vsel %vm833, %v987, 0
        %1317 = vmatpush.bf16.msra.mxu0 0
        %1318 = vmatpush.bf16.msra.mxu0 0
        %1319 = vmatpush.bf16.msra.mxu0 0
        %1320 = vmatpush.bf16.msra.mxu0 0
        %1321 = vmatpush.bf16.msra.mxu0 0
        %1322 = vmatpush.bf16.msra.mxu0 0
        %1323 = vmatpush.bf16.msra.mxu0 0
        %1324 = vmatpush.bf16.msra.mxu0 %v1312
        %1325 = vmatmul.bf16.gmra.mxu0 %v1315
        %v1326 = vpop.f32.mrf.mxu0
        %v1327 = vadd.f32 %v1304, %v1326
        %v1328 = vpop.f32.mrf.mxu0
        %v1329 = vadd.f32 %v1306, %v1328
        %1330 = vdwg.mxu0
        %s1331 = scalar_lea.vmem %s578, 64
        %v1332 = vld [vmem:[%s1331] sm:$0xf]
        %v1333 = vld [vmem:[%s1331 + $0x4] sm:$0xf]
        %v1334 = vld [vmem:[%s1331 + $0x8] sm:$0xf]
        %v1335 = vld [vmem:[%s1331 + $0xc] sm:$0xf]
        %v1336 = vld [vmem:[%s1331 + $0x10] sm:$0xf]
        %v1337 = vld [vmem:[%s1331 + $0x14] sm:$0xf]
        %v1338 = vld [vmem:[%s1331 + $0x18] sm:$0xf]
        %v1339 = vld [vmem:[%s1331 + $0x1c] sm:$0xf]
        %v1348 = vunpack.c.l.b16 %v1332
        %v1349 = vunpack.c.l.b16 %v1333
        %v1350 = vunpack.c.l.b16 %v1334
        %v1351 = vunpack.c.l.b16 %v1335
        %v1352 = vunpack.c.l.b16 %v1336
        %v1353 = vunpack.c.l.b16 %v1337
        %v1354 = vunpack.c.l.b16 %v1338
        %v1355 = vunpack.c.l.b16 %v1339
        %v1356 = vpack.c.b16 %v1349, %v1348
        %v1357 = vpack.c.b16 %v1351, %v1350
        %v1358 = vpack.c.b16 %v1353, %v1352
        %v1359 = vpack.c.b16 %v1355, %v1354
        %1364 = vmatpush.bf16.msra.mxu0 0
        %1365 = vmatpush.bf16.msra.mxu0 0
        %1366 = vmatpush.bf16.msra.mxu0 0
        %1367 = vmatpush.bf16.msra.mxu0 0
        %1368 = vmatpush.bf16.msra.mxu0 %v1359
        %1369 = vmatpush.bf16.msra.mxu0 %v1358
        %1370 = vmatpush.bf16.msra.mxu0 %v1357
        %1371 = vmatpush.bf16.msra.mxu0 %v1356
        %1372 = vmatmul.bf16.gmra.mxu0 %v725
        %v1373 = vpop.f32.mrf.mxu0
        %v1374 = vadd.f32 0.0, %v1373
        %v1375 = vpop.f32.mrf.mxu0
        %v1376 = vadd.f32 0.0, %v1375
        %1377 = vdwg.mxu0
        %s1378 = scalar_lea.vmem %s583, 64
        %v1379 = vld [vmem:[%s1378] sm:$0xf]
        %v1380 = vld [vmem:[%s1378 + $0x4] sm:$0xf]
        %v1381 = vld [vmem:[%s1378 + $0x8] sm:$0xf]
        %v1382 = vld [vmem:[%s1378 + $0xc] sm:$0xf]
        %v1383 = vld [vmem:[%s1378 + $0x10] sm:$0xf]
        %v1384 = vld [vmem:[%s1378 + $0x14] sm:$0xf]
        %v1385 = vld [vmem:[%s1378 + $0x18] sm:$0xf]
        %v1386 = vld [vmem:[%s1378 + $0x1c] sm:$0xf]
        %v1395 = vunpack.c.l.b16 %v1379
        %v1396 = vunpack.c.l.b16 %v1380
        %v1397 = vunpack.c.l.b16 %v1381
        %v1398 = vunpack.c.l.b16 %v1382
        %v1399 = vunpack.c.l.b16 %v1383
        %v1400 = vunpack.c.l.b16 %v1384
        %v1401 = vunpack.c.l.b16 %v1385
        %v1402 = vunpack.c.l.b16 %v1386
        %v1403 = vpack.c.b16 %v1396, %v1395
        %v1404 = vpack.c.b16 %v1398, %v1397
        %v1405 = vpack.c.b16 %v1400, %v1399
        %v1406 = vpack.c.b16 %v1402, %v1401
        %1411 = vmatpush.bf16.msra.mxu0 0
        %1412 = vmatpush.bf16.msra.mxu0 0
        %1413 = vmatpush.bf16.msra.mxu0 0
        %1414 = vmatpush.bf16.msra.mxu0 0
        %1415 = vmatpush.bf16.msra.mxu0 %v1406
        %1416 = vmatpush.bf16.msra.mxu0 %v1405
        %1417 = vmatpush.bf16.msra.mxu0 %v1404
        %1418 = vmatpush.bf16.msra.mxu0 %v1403
        %1419 = vmatmul.bf16.gmra.mxu0 %v725
        %v1420 = vpop.f32.mrf.mxu0
        %v1421 = vadd.f32 0.0, %v1420
        %v1422 = vpop.f32.mrf.mxu0
        %v1423 = vadd.f32 0.0, %v1422
        %1424 = vdwg.mxu0
        %s1425 = scalar_lea.vmem %s588, 64
        %v1426 = vld [vmem:[%s1425] sm:$0xf]
        %v1427 = vld [vmem:[%s1425 + $0x4] sm:$0xf]
        %v1428 = vld [vmem:[%s1425 + $0x8] sm:$0xf]
        %v1429 = vld [vmem:[%s1425 + $0xc] sm:$0xf]
        %v1430 = vld [vmem:[%s1425 + $0x10] sm:$0xf]
        %v1431 = vld [vmem:[%s1425 + $0x14] sm:$0xf]
        %v1432 = vld [vmem:[%s1425 + $0x18] sm:$0xf]
        %v1433 = vld [vmem:[%s1425 + $0x1c] sm:$0xf]
        %v1442 = vunpack.c.l.b16 %v1426
        %v1443 = vunpack.c.l.b16 %v1427
        %v1444 = vunpack.c.l.b16 %v1428
        %v1445 = vunpack.c.l.b16 %v1429
        %v1446 = vunpack.c.l.b16 %v1430
        %v1447 = vunpack.c.l.b16 %v1431
        %v1448 = vunpack.c.l.b16 %v1432
        %v1449 = vunpack.c.l.b16 %v1433
        %v1450 = vpack.c.b16 %v1443, %v1442
        %v1451 = vpack.c.b16 %v1445, %v1444
        %v1452 = vpack.c.b16 %v1447, %v1446
        %v1453 = vpack.c.b16 %v1449, %v1448
        %1458 = vmatpush.bf16.msra.mxu0 0
        %1459 = vmatpush.bf16.msra.mxu0 0
        %1460 = vmatpush.bf16.msra.mxu0 0
        %1461 = vmatpush.bf16.msra.mxu0 0
        %1462 = vmatpush.bf16.msra.mxu0 %v1453
        %1463 = vmatpush.bf16.msra.mxu0 %v1452
        %1464 = vmatpush.bf16.msra.mxu0 %v1451
        %1465 = vmatpush.bf16.msra.mxu0 %v1450
        %1466 = vmatmul.bf16.gmra.mxu0 %v725
        %v1467 = vpop.f32.mrf.mxu0
        %v1468 = vadd.f32 0.0, %v1467
        %v1469 = vpop.f32.mrf.mxu0
        %v1470 = vadd.f32 0.0, %v1469
        %1471 = vdwg.mxu0
        %v1473 = vsel %vm833, %v1374, 0
        %v1476 = vsel %vm833, %v1421, 0
        %1478 = vmatpush.xpose.msra.mxu0 0.0
        %1479 = vmatpush.xpose.msra.mxu0 0.0
        %1480 = vmatpush.xpose.msra.mxu0 0.0
        %1481 = vmatpush.xpose.msra.mxu0 0.0
        %1482 = vmatpush.xpose.msra.mxu0 0.0
        %1483 = vmatpush.xpose.msra.mxu0 0.0
        %1484 = vmatpush.xpose.msra.mxu0 0.0
        %1485 = vmatpush.xpose.msra.mxu0 0.0
        %1486 = vmatpush.xpose.msra.mxu0 0.0
        %1487 = vmatpush.xpose.msra.mxu0 0.0
        %1488 = vmatpush.xpose.msra.mxu0 0.0
        %1489 = vmatpush.xpose.msra.mxu0 0.0
        %1490 = vmatpush.xpose.msra.mxu0 0.0
        %1491 = vmatpush.xpose.msra.mxu0 0.0
        %1492 = vmatpush.xpose.msra.mxu0 0.0
        %1493 = vmatpush.xpose.msra.mxu0 %v1476
        %1494 = vmatmul.f32.gmra.mxu0 %v1473
        %v1495 = vpop.f32.mrf.mxu0
        %v1496 = vadd.f32 0.0, %v1495
        %1497 = vdwg.mxu0
        %v1499 = vsel %vm833, %v1376, 0
        %v1502 = vsel %vm833, %v1423, 0
        %1504 = vmatpush.xpose.msra.mxu0 0.0
        %1505 = vmatpush.xpose.msra.mxu0 0.0
        %1506 = vmatpush.xpose.msra.mxu0 0.0
        %1507 = vmatpush.xpose.msra.mxu0 0.0
        %1508 = vmatpush.xpose.msra.mxu0 0.0
        %1509 = vmatpush.xpose.msra.mxu0 0.0
        %1510 = vmatpush.xpose.msra.mxu0 0.0
        %1511 = vmatpush.xpose.msra.mxu0 0.0
        %1512 = vmatpush.xpose.msra.mxu0 0.0
        %1513 = vmatpush.xpose.msra.mxu0 0.0
        %1514 = vmatpush.xpose.msra.mxu0 0.0
        %1515 = vmatpush.xpose.msra.mxu0 0.0
        %1516 = vmatpush.xpose.msra.mxu0 0.0
        %1517 = vmatpush.xpose.msra.mxu0 0.0
        %1518 = vmatpush.xpose.msra.mxu0 0.0
        %1519 = vmatpush.xpose.msra.mxu0 %v1502
        %1520 = vmatmul.f32.gmra.mxu0 %v1499
        %v1521 = vpop.f32.mrf.mxu0
        %v1522 = vadd.f32 0.0, %v1521
        %1523 = vdwg.mxu0
        %v1524 = vmul.f32 %v1496, 0.25
        %v1525 = vmul.f32 %v1522, 0.25
        %v1526 = vsel %vm889, %v1524, -1e+30
        %v1527 = vsel %vm889, %v1525, -1e+30
        %v1528 = vsel %vm892, %v1526, -inf
        %1529 = vmax.xlane.f32.xlu0 %v1528
        %v1530 = vpop.xlane.xlu0 %1529
        %v1531 = vsel %vm892, %v1527, -inf
        %1532 = vmax.xlane.f32.xlu0 %v1531
        %v1533 = vpop.xlane.xlu0 %1532
        %v1534 = vsub.f32 %v1526, %v1530
        %v1535 = vsub.f32 %v1527, %v1533
        %v1536 = vmul.f32 %v1534, 1.442695
        %v1537 = vpow.pop %v1536
        %v1538 = vmul.f32 %v1535, 1.442695
        %v1539 = vpow.pop %v1538
        %v1540 = vsel %vm892, %v1537, 0.0
        %1541 = vadd.xlane.f32.xlu0 %v1540
        %v1542 = vpop.xlane.xlu0 %1541
        %v1543 = vsel %vm892, %v1539, 0.0
        %1544 = vadd.xlane.f32.xlu0 %v1543
        %v1545 = vpop.xlane.xlu0 %1544
        %v1546 = vrcp.pop %v1542
        %v1547 = vmul.f32 %v1542, %v1546
        %v1548 = vsub.f32 1.0, %v1547
        %v1549 = vmul.f32 %v1546, %v1548
        %v1550 = vadd.f32 %v1546, %v1549
        %vm1551 = vweird.f32 %v1542
        %vm1552 = vweird.f32 %v1546
        %vm1553 = vmor %vm1551, %vm1552
        %v1554 = vsel %vm1553, %v1546, %v1550
        %v1555 = vand.u32 2147483647, %v1542
        %vm1556 = vcmp.eq.f32.partialorder %v1555, 8.507059e+37
        %v1557 = vand.u32 %v1542, 2147483648
        %v1558 = vor.u32 1.1754944e-38, %v1557
        %v1559 = vsel %vm1556, %v1558, %v1554
        %v1560 = vmul.f32 %v1537, %v1559
        %v1561 = vrcp.pop %v1545
        %v1562 = vmul.f32 %v1545, %v1561
        %v1563 = vsub.f32 1.0, %v1562
        %v1564 = vmul.f32 %v1561, %v1563
        %v1565 = vadd.f32 %v1561, %v1564
        %vm1566 = vweird.f32 %v1545
        %vm1567 = vweird.f32 %v1561
        %vm1568 = vmor %vm1566, %vm1567
        %v1569 = vsel %vm1568, %v1561, %v1565
        %v1570 = vand.u32 2147483647, %v1545
        %vm1571 = vcmp.eq.f32.partialorder %v1570, 8.507059e+37
        %v1572 = vand.u32 %v1545, 2147483648
        %v1573 = vor.u32 1.1754944e-38, %v1572
        %v1574 = vsel %vm1571, %v1573, %v1569
        %v1575 = vmul.f32 %v1539, %v1574
        %v1577 = vsel %vm892, %v1560, 0
        %1579 = vmatpush.msra.mxu0 0.0
        %1580 = vmatpush.msra.mxu0 0.0
        %1581 = vmatpush.msra.mxu0 0.0
        %1582 = vmatpush.msra.mxu0 0.0
        %1583 = vmatpush.msra.mxu0 0.0
        %1584 = vmatpush.msra.mxu0 0.0
        %1585 = vmatpush.msra.mxu0 0.0
        %1586 = vmatpush.msra.mxu0 0.0
        %1587 = vmatpush.msra.mxu0 0.0
        %1588 = vmatpush.msra.mxu0 0.0
        %1589 = vmatpush.msra.mxu0 0.0
        %1590 = vmatpush.msra.mxu0 0.0
        %1591 = vmatpush.msra.mxu0 0.0
        %1592 = vmatpush.msra.mxu0 0.0
        %1593 = vmatpush.msra.mxu0 0.0
        %1594 = vmatpush.msra.mxu0 %v1468
        %1595 = vmatmul.f32.gmra.mxu0 %v1577
        %v1596 = vpop.f32.mrf.mxu0
        %v1597 = vadd.f32 0.0, %v1596
        %1598 = vdwg.mxu0
        %v1600 = vsel %vm892, %v1575, 0
        %1602 = vmatpush.msra.mxu0 0.0
        %1603 = vmatpush.msra.mxu0 0.0
        %1604 = vmatpush.msra.mxu0 0.0
        %1605 = vmatpush.msra.mxu0 0.0
        %1606 = vmatpush.msra.mxu0 0.0
        %1607 = vmatpush.msra.mxu0 0.0
        %1608 = vmatpush.msra.mxu0 0.0
        %1609 = vmatpush.msra.mxu0 0.0
        %1610 = vmatpush.msra.mxu0 0.0
        %1611 = vmatpush.msra.mxu0 0.0
        %1612 = vmatpush.msra.mxu0 0.0
        %1613 = vmatpush.msra.mxu0 0.0
        %1614 = vmatpush.msra.mxu0 0.0
        %1615 = vmatpush.msra.mxu0 0.0
        %1616 = vmatpush.msra.mxu0 0.0
        %1617 = vmatpush.msra.mxu0 %v1470
        %1618 = vmatmul.f32.gmra.mxu0 %v1600
        %v1619 = vpop.f32.mrf.mxu0
        %v1620 = vadd.f32 0.0, %v1619
        %1621 = vdwg.mxu0
        %v1622 = vpack.c.bf16 %v1620, %v1597
        %s1623 = scalar_lea.vmem %s593, 16
        %v1624 = vld [vmem:[%s1623] sm:$0xf]
        %v1625 = vld [vmem:[%s1623 + $0x4] sm:$0xf]
        %v1628 = vunpack.c.l.b16 %v1624
        %v1629 = vunpack.c.l.b16 %v1625
        %v1630 = vpack.c.b16 %v1629, %v1628
        %v1633 = vsel %vm833, %v1622, 0
        %1635 = vmatpush.bf16.msra.mxu0 0
        %1636 = vmatpush.bf16.msra.mxu0 0
        %1637 = vmatpush.bf16.msra.mxu0 0
        %1638 = vmatpush.bf16.msra.mxu0 0
        %1639 = vmatpush.bf16.msra.mxu0 0
        %1640 = vmatpush.bf16.msra.mxu0 0
        %1641 = vmatpush.bf16.msra.mxu0 0
        %1642 = vmatpush.bf16.msra.mxu0 %v1630
        %1643 = vmatmul.bf16.gmra.mxu0 %v1633
        %v1644 = vpop.f32.mrf.mxu0
        %v1645 = vadd.f32 0.0, %v1644
        %v1646 = vpop.f32.mrf.mxu0
        %v1647 = vadd.f32 0.0, %v1646
        %1648 = vdwg.mxu0
        %v1649 = vadd.f32 %v1327, %v1645
        %v1650 = vadd.f32 %v1329, %v1647
        %s1651 = scalar_lea.vmem %s578, 96
        %v1652 = vld [vmem:[%s1651] sm:$0xf]
        %v1653 = vld [vmem:[%s1651 + $0x4] sm:$0xf]
        %v1654 = vld [vmem:[%s1651 + $0x8] sm:$0xf]
        %v1655 = vld [vmem:[%s1651 + $0xc] sm:$0xf]
        %v1656 = vld [vmem:[%s1651 + $0x10] sm:$0xf]
        %v1657 = vld [vmem:[%s1651 + $0x14] sm:$0xf]
        %v1658 = vld [vmem:[%s1651 + $0x18] sm:$0xf]
        %v1659 = vld [vmem:[%s1651 + $0x1c] sm:$0xf]
        %v1668 = vunpack.c.l.b16 %v1652
        %v1669 = vunpack.c.l.b16 %v1653
        %v1670 = vunpack.c.l.b16 %v1654
        %v1671 = vunpack.c.l.b16 %v1655
        %v1672 = vunpack.c.l.b16 %v1656
        %v1673 = vunpack.c.l.b16 %v1657
        %v1674 = vunpack.c.l.b16 %v1658
        %v1675 = vunpack.c.l.b16 %v1659
        %v1676 = vpack.c.b16 %v1669, %v1668
        %v1677 = vpack.c.b16 %v1671, %v1670
        %v1678 = vpack.c.b16 %v1673, %v1672
        %v1679 = vpack.c.b16 %v1675, %v1674
        %1684 = vmatpush.bf16.msra.mxu0 0
        %1685 = vmatpush.bf16.msra.mxu0 0
        %1686 = vmatpush.bf16.msra.mxu0 0
        %1687 = vmatpush.bf16.msra.mxu0 0
        %1688 = vmatpush.bf16.msra.mxu0 %v1679
        %1689 = vmatpush.bf16.msra.mxu0 %v1678
        %1690 = vmatpush.bf16.msra.mxu0 %v1677
        %1691 = vmatpush.bf16.msra.mxu0 %v1676
        %1692 = vmatmul.bf16.gmra.mxu0 %v725
        %v1693 = vpop.f32.mrf.mxu0
        %v1694 = vadd.f32 0.0, %v1693
        %v1695 = vpop.f32.mrf.mxu0
        %v1696 = vadd.f32 0.0, %v1695
        %1697 = vdwg.mxu0
        %s1698 = scalar_lea.vmem %s583, 96
        %v1699 = vld [vmem:[%s1698] sm:$0xf]
        %v1700 = vld [vmem:[%s1698 + $0x4] sm:$0xf]
        %v1701 = vld [vmem:[%s1698 + $0x8] sm:$0xf]
        %v1702 = vld [vmem:[%s1698 + $0xc] sm:$0xf]
        %v1703 = vld [vmem:[%s1698 + $0x10] sm:$0xf]
        %v1704 = vld [vmem:[%s1698 + $0x14] sm:$0xf]
        %v1705 = vld [vmem:[%s1698 + $0x18] sm:$0xf]
        %v1706 = vld [vmem:[%s1698 + $0x1c] sm:$0xf]
        %v1715 = vunpack.c.l.b16 %v1699
        %v1716 = vunpack.c.l.b16 %v1700
        %v1717 = vunpack.c.l.b16 %v1701
        %v1718 = vunpack.c.l.b16 %v1702
        %v1719 = vunpack.c.l.b16 %v1703
        %v1720 = vunpack.c.l.b16 %v1704
        %v1721 = vunpack.c.l.b16 %v1705
        %v1722 = vunpack.c.l.b16 %v1706
        %v1723 = vpack.c.b16 %v1716, %v1715
        %v1724 = vpack.c.b16 %v1718, %v1717
        %v1725 = vpack.c.b16 %v1720, %v1719
        %v1726 = vpack.c.b16 %v1722, %v1721
        %1731 = vmatpush.bf16.msra.mxu0 0
        %1732 = vmatpush.bf16.msra.mxu0 0
        %1733 = vmatpush.bf16.msra.mxu0 0
        %1734 = vmatpush.bf16.msra.mxu0 0
        %1735 = vmatpush.bf16.msra.mxu0 %v1726
        %1736 = vmatpush.bf16.msra.mxu0 %v1725
        %1737 = vmatpush.bf16.msra.mxu0 %v1724
        %1738 = vmatpush.bf16.msra.mxu0 %v1723
        %1739 = vmatmul.bf16.gmra.mxu0 %v725
        %v1740 = vpop.f32.mrf.mxu0
        %v1741 = vadd.f32 0.0, %v1740
        %v1742 = vpop.f32.mrf.mxu0
        %v1743 = vadd.f32 0.0, %v1742
        %1744 = vdwg.mxu0
        %s1745 = scalar_lea.vmem %s588, 96
        %v1746 = vld [vmem:[%s1745] sm:$0xf]
        %v1747 = vld [vmem:[%s1745 + $0x4] sm:$0xf]
        %v1748 = vld [vmem:[%s1745 + $0x8] sm:$0xf]
        %v1749 = vld [vmem:[%s1745 + $0xc] sm:$0xf]
        %v1750 = vld [vmem:[%s1745 + $0x10] sm:$0xf]
        %v1751 = vld [vmem:[%s1745 + $0x14] sm:$0xf]
        %v1752 = vld [vmem:[%s1745 + $0x18] sm:$0xf]
        %v1753 = vld [vmem:[%s1745 + $0x1c] sm:$0xf]
        %v1762 = vunpack.c.l.b16 %v1746
        %v1763 = vunpack.c.l.b16 %v1747
        %v1764 = vunpack.c.l.b16 %v1748
        %v1765 = vunpack.c.l.b16 %v1749
        %v1766 = vunpack.c.l.b16 %v1750
        %v1767 = vunpack.c.l.b16 %v1751
        %v1768 = vunpack.c.l.b16 %v1752
        %v1769 = vunpack.c.l.b16 %v1753
        %v1770 = vpack.c.b16 %v1763, %v1762
        %v1771 = vpack.c.b16 %v1765, %v1764
        %v1772 = vpack.c.b16 %v1767, %v1766
        %v1773 = vpack.c.b16 %v1769, %v1768
        %1778 = vmatpush.bf16.msra.mxu0 0
        %1779 = vmatpush.bf16.msra.mxu0 0
        %1780 = vmatpush.bf16.msra.mxu0 0
        %1781 = vmatpush.bf16.msra.mxu0 0
        %1782 = vmatpush.bf16.msra.mxu0 %v1773
        %1783 = vmatpush.bf16.msra.mxu0 %v1772
        %1784 = vmatpush.bf16.msra.mxu0 %v1771
        %1785 = vmatpush.bf16.msra.mxu0 %v1770
        %1786 = vmatmul.bf16.gmra.mxu0 %v725
        %v1787 = vpop.f32.mrf.mxu0
        %v1788 = vadd.f32 0.0, %v1787
        %v1789 = vpop.f32.mrf.mxu0
        %v1790 = vadd.f32 0.0, %v1789
        %1791 = vdwg.mxu0
        %v1793 = vsel %vm833, %v1694, 0
        %v1796 = vsel %vm833, %v1741, 0
        %1798 = vmatpush.xpose.msra.mxu0 0.0
        %1799 = vmatpush.xpose.msra.mxu0 0.0
        %1800 = vmatpush.xpose.msra.mxu0 0.0
        %1801 = vmatpush.xpose.msra.mxu0 0.0
        %1802 = vmatpush.xpose.msra.mxu0 0.0
        %1803 = vmatpush.xpose.msra.mxu0 0.0
        %1804 = vmatpush.xpose.msra.mxu0 0.0
        %1805 = vmatpush.xpose.msra.mxu0 0.0
        %1806 = vmatpush.xpose.msra.mxu0 0.0
        %1807 = vmatpush.xpose.msra.mxu0 0.0
        %1808 = vmatpush.xpose.msra.mxu0 0.0
        %1809 = vmatpush.xpose.msra.mxu0 0.0
        %1810 = vmatpush.xpose.msra.mxu0 0.0
        %1811 = vmatpush.xpose.msra.mxu0 0.0
        %1812 = vmatpush.xpose.msra.mxu0 0.0
        %1813 = vmatpush.xpose.msra.mxu0 %v1796
        %1814 = vmatmul.f32.gmra.mxu0 %v1793
        %v1815 = vpop.f32.mrf.mxu0
        %v1816 = vadd.f32 0.0, %v1815
        %1817 = vdwg.mxu0
        %v1819 = vsel %vm833, %v1696, 0
        %v1822 = vsel %vm833, %v1743, 0
        %1824 = vmatpush.xpose.msra.mxu0 0.0
        %1825 = vmatpush.xpose.msra.mxu0 0.0
        %1826 = vmatpush.xpose.msra.mxu0 0.0
        %1827 = vmatpush.xpose.msra.mxu0 0.0
        %1828 = vmatpush.xpose.msra.mxu0 0.0
        %1829 = vmatpush.xpose.msra.mxu0 0.0
        %1830 = vmatpush.xpose.msra.mxu0 0.0
        %1831 = vmatpush.xpose.msra.mxu0 0.0
        %1832 = vmatpush.xpose.msra.mxu0 0.0
        %1833 = vmatpush.xpose.msra.mxu0 0.0
        %1834 = vmatpush.xpose.msra.mxu0 0.0
        %1835 = vmatpush.xpose.msra.mxu0 0.0
        %1836 = vmatpush.xpose.msra.mxu0 0.0
        %1837 = vmatpush.xpose.msra.mxu0 0.0
        %1838 = vmatpush.xpose.msra.mxu0 0.0
        %1839 = vmatpush.xpose.msra.mxu0 %v1822
        %1840 = vmatmul.f32.gmra.mxu0 %v1819
        %v1841 = vpop.f32.mrf.mxu0
        %v1842 = vadd.f32 0.0, %v1841
        %1843 = vdwg.mxu0
        %v1844 = vmul.f32 %v1816, 0.25
        %v1845 = vmul.f32 %v1842, 0.25
        %v1846 = vsel %vm889, %v1844, -1e+30
        %v1847 = vsel %vm889, %v1845, -1e+30
        %v1848 = vsel %vm892, %v1846, -inf
        %1849 = vmax.xlane.f32.xlu0 %v1848
        %v1850 = vpop.xlane.xlu0 %1849
        %v1851 = vsel %vm892, %v1847, -inf
        %1852 = vmax.xlane.f32.xlu0 %v1851
        %v1853 = vpop.xlane.xlu0 %1852
        %v1854 = vsub.f32 %v1846, %v1850
        %v1855 = vsub.f32 %v1847, %v1853
        %v1856 = vmul.f32 %v1854, 1.442695
        %v1857 = vpow.pop %v1856
        %v1858 = vmul.f32 %v1855, 1.442695
        %v1859 = vpow.pop %v1858
        %v1860 = vsel %vm892, %v1857, 0.0
        %1861 = vadd.xlane.f32.xlu0 %v1860
        %v1862 = vpop.xlane.xlu0 %1861
        %v1863 = vsel %vm892, %v1859, 0.0
        %1864 = vadd.xlane.f32.xlu0 %v1863
        %v1865 = vpop.xlane.xlu0 %1864
        %v1866 = vrcp.pop %v1862
        %v1867 = vmul.f32 %v1862, %v1866
        %v1868 = vsub.f32 1.0, %v1867
        %v1869 = vmul.f32 %v1866, %v1868
        %v1870 = vadd.f32 %v1866, %v1869
        %vm1871 = vweird.f32 %v1862
        %vm1872 = vweird.f32 %v1866
        %vm1873 = vmor %vm1871, %vm1872
        %v1874 = vsel %vm1873, %v1866, %v1870
        %v1875 = vand.u32 2147483647, %v1862
        %vm1876 = vcmp.eq.f32.partialorder %v1875, 8.507059e+37
        %v1877 = vand.u32 %v1862, 2147483648
        %v1878 = vor.u32 1.1754944e-38, %v1877
        %v1879 = vsel %vm1876, %v1878, %v1874
        %v1880 = vmul.f32 %v1857, %v1879
        %v1881 = vrcp.pop %v1865
        %v1882 = vmul.f32 %v1865, %v1881
        %v1883 = vsub.f32 1.0, %v1882
        %v1884 = vmul.f32 %v1881, %v1883
        %v1885 = vadd.f32 %v1881, %v1884
        %vm1886 = vweird.f32 %v1865
        %vm1887 = vweird.f32 %v1881
        %vm1888 = vmor %vm1886, %vm1887
        %v1889 = vsel %vm1888, %v1881, %v1885
        %v1890 = vand.u32 2147483647, %v1865
        %vm1891 = vcmp.eq.f32.partialorder %v1890, 8.507059e+37
        %v1892 = vand.u32 %v1865, 2147483648
        %v1893 = vor.u32 1.1754944e-38, %v1892
        %v1894 = vsel %vm1891, %v1893, %v1889
        %v1895 = vmul.f32 %v1859, %v1894
        %v1897 = vsel %vm892, %v1880, 0
        %1899 = vmatpush.msra.mxu0 0.0
        %1900 = vmatpush.msra.mxu0 0.0
        %1901 = vmatpush.msra.mxu0 0.0
        %1902 = vmatpush.msra.mxu0 0.0
        %1903 = vmatpush.msra.mxu0 0.0
        %1904 = vmatpush.msra.mxu0 0.0
        %1905 = vmatpush.msra.mxu0 0.0
        %1906 = vmatpush.msra.mxu0 0.0
        %1907 = vmatpush.msra.mxu0 0.0
        %1908 = vmatpush.msra.mxu0 0.0
        %1909 = vmatpush.msra.mxu0 0.0
        %1910 = vmatpush.msra.mxu0 0.0
        %1911 = vmatpush.msra.mxu0 0.0
        %1912 = vmatpush.msra.mxu0 0.0
        %1913 = vmatpush.msra.mxu0 0.0
        %1914 = vmatpush.msra.mxu0 %v1788
        %1915 = vmatmul.f32.gmra.mxu0 %v1897
        %v1916 = vpop.f32.mrf.mxu0
        %v1917 = vadd.f32 0.0, %v1916
        %1918 = vdwg.mxu0
        %v1920 = vsel %vm892, %v1895, 0
        %1922 = vmatpush.msra.mxu0 0.0
        %1923 = vmatpush.msra.mxu0 0.0
        %1924 = vmatpush.msra.mxu0 0.0
        %1925 = vmatpush.msra.mxu0 0.0
        %1926 = vmatpush.msra.mxu0 0.0
        %1927 = vmatpush.msra.mxu0 0.0
        %1928 = vmatpush.msra.mxu0 0.0
        %1929 = vmatpush.msra.mxu0 0.0
        %1930 = vmatpush.msra.mxu0 0.0
        %1931 = vmatpush.msra.mxu0 0.0
        %1932 = vmatpush.msra.mxu0 0.0
        %1933 = vmatpush.msra.mxu0 0.0
        %1934 = vmatpush.msra.mxu0 0.0
        %1935 = vmatpush.msra.mxu0 0.0
        %1936 = vmatpush.msra.mxu0 0.0
        %1937 = vmatpush.msra.mxu0 %v1790
        %1938 = vmatmul.f32.gmra.mxu0 %v1920
        %v1939 = vpop.f32.mrf.mxu0
        %v1940 = vadd.f32 0.0, %v1939
        %1941 = vdwg.mxu0
        %v1942 = vpack.c.bf16 %v1940, %v1917
        %s1943 = scalar_lea.vmem %s593, 24
        %v1944 = vld [vmem:[%s1943] sm:$0xf]
        %v1945 = vld [vmem:[%s1943 + $0x4] sm:$0xf]
        %v1948 = vunpack.c.l.b16 %v1944
        %v1949 = vunpack.c.l.b16 %v1945
        %v1950 = vpack.c.b16 %v1949, %v1948
        %v1953 = vsel %vm833, %v1942, 0
        %1955 = vmatpush.bf16.msra.mxu0 0
        %1956 = vmatpush.bf16.msra.mxu0 0
        %1957 = vmatpush.bf16.msra.mxu0 0
        %1958 = vmatpush.bf16.msra.mxu0 0
        %1959 = vmatpush.bf16.msra.mxu0 0
        %1960 = vmatpush.bf16.msra.mxu0 0
        %1961 = vmatpush.bf16.msra.mxu0 0
        %1962 = vmatpush.bf16.msra.mxu0 %v1950
        %1963 = vmatmul.bf16.gmra.mxu0 %v1953
        %v1964 = vpop.f32.mrf.mxu0
        %v1965 = vadd.f32 0.0, %v1964
        %v1966 = vpop.f32.mrf.mxu0
        %v1967 = vadd.f32 0.0, %v1966
        %1968 = vdwg.mxu0
        %v1969 = vadd.f32 %v1649, %v1965
        %v1970 = vadd.f32 %v1650, %v1967
        %v1971 = vadd.f32 %v620, %v1969
        %v1972 = vadd.f32 %v621, %v1970
        %v1973 = vld [vmem:[%s596] sm:$0x1]
        %v1974 = vld [vmem:[%s599] sm:$0x1]
        %v1975 = vsel %vm624, %v1971, 0.0
        %1976 = vadd.xlane.f32.xlu0 %v1975
        %v1977 = vpop.xlane.xlu0 %1976
        %v1978 = vsel %vm624, %v1972, 0.0
        %1979 = vadd.xlane.f32.xlu0 %v1978
        %v1980 = vpop.xlane.xlu0 %1979
        %v1981 = vmul.f32 %v1977, %v637
        %v1982 = vmul.f32 %v1980, %v637
        %v1983 = vsub.f32 %v1971, %v1981
        %v1984 = vsub.f32 %v1972, %v1982
        %v1985 = vmul.f32 %v1983, %v1983
        %v1986 = vmul.f32 %v1984, %v1984
        %v1987 = vsel %vm624, %v1985, 0.0
        %1988 = vadd.xlane.f32.xlu0 %v1987
        %v1989 = vpop.xlane.xlu0 %1988
        %v1990 = vsel %vm624, %v1986, 0.0
        %1991 = vadd.xlane.f32.xlu0 %v1990
        %v1992 = vpop.xlane.xlu0 %1991
        %v1993 = vmul.f32 %v1989, %v637
        %v1994 = vmul.f32 %v1992, %v637
        %v1995 = vadd.f32 %v1993, 1e-05
        %v1996 = vadd.f32 %v1994, 1e-05
        %v1997 = vrsqrt.pop %v1995
        %v1998 = vmul.f32 %v1997, %v1995
        %v1999 = vmul.f32 %v1998, %v1997
        %v2000 = vmul.f32 0.5, %v1999
        %v2001 = vsub.f32 1.5, %v2000
        %v2002 = vmul.f32 %v1997, %v2001
        %vm2003 = vweird.f32 %v1995
        %vm2004 = vweird.f32 %v1997
        %vm2005 = vmor %vm2003, %vm2004
        %v2006 = vsel %vm2005, %v1997, %v2002
        %v2007 = vrsqrt.pop %v1996
        %v2008 = vmul.f32 %v2007, %v1996
        %v2009 = vmul.f32 %v2008, %v2007
        %v2010 = vmul.f32 0.5, %v2009
        %v2011 = vsub.f32 1.5, %v2010
        %v2012 = vmul.f32 %v2007, %v2011
        %vm2013 = vweird.f32 %v1996
        %vm2014 = vweird.f32 %v2007
        %vm2015 = vmor %vm2013, %vm2014
        %v2016 = vsel %vm2015, %v2007, %v2012
        %v2017 = vmul.f32 %v1983, %v2006
        %v2018 = vmul.f32 %v1984, %v2016
        %v2020 = vperm.slane %v1973, 0
        %v2022 = vmul.f32 %v2017, %v2020
        %v2023 = vmul.f32 %v2018, %v2020
        %v2025 = vperm.slane %v1974, 0
        %v2027 = vadd.f32 %v2022, %v2025
        %v2028 = vadd.f32 %v2023, %v2025
        %v2029 = vpack.c.bf16 %v2028, %v2027
        %v2030 = vld [vmem:[%s604] sm:$0xff]
        %v2031 = vld [vmem:[%s604 + $0x8] sm:$0xff]
        %v2032 = vld [vmem:[%s604 + $0x10] sm:$0xff]
        %v2033 = vld [vmem:[%s604 + $0x18] sm:$0xff]
        %v2034 = vld [vmem:[%s604 + $0x20] sm:$0xff]
        %v2035 = vld [vmem:[%s604 + $0x28] sm:$0xff]
        %v2036 = vld [vmem:[%s604 + $0x30] sm:$0xff]
        %v2037 = vld [vmem:[%s604 + $0x38] sm:$0xff]
        %v2046 = vunpack.c.l.b16 %v2030
        %v2047 = vunpack.c.h.b16 %v2030
        %v2048 = vunpack.c.l.b16 %v2031
        %v2049 = vunpack.c.h.b16 %v2031
        %v2050 = vunpack.c.l.b16 %v2032
        %v2051 = vunpack.c.h.b16 %v2032
        %v2052 = vunpack.c.l.b16 %v2033
        %v2053 = vunpack.c.h.b16 %v2033
        %v2054 = vunpack.c.l.b16 %v2034
        %v2055 = vunpack.c.h.b16 %v2034
        %v2056 = vunpack.c.l.b16 %v2035
        %v2057 = vunpack.c.h.b16 %v2035
        %v2058 = vunpack.c.l.b16 %v2036
        %v2059 = vunpack.c.h.b16 %v2036
        %v2060 = vunpack.c.l.b16 %v2037
        %v2061 = vunpack.c.h.b16 %v2037
        %v2062 = vpack.c.b16 %v2048, %v2046
        %v2063 = vpack.c.b16 %v2049, %v2047
        %v2064 = vpack.c.b16 %v2052, %v2050
        %v2065 = vpack.c.b16 %v2053, %v2051
        %v2066 = vpack.c.b16 %v2056, %v2054
        %v2067 = vpack.c.b16 %v2057, %v2055
        %v2068 = vpack.c.b16 %v2060, %v2058
        %v2069 = vpack.c.b16 %v2061, %v2059
        %v2079 = vsel %vm624, %v2029, 0
        %2081 = vmatpush.bf16.msra.mxu0 0
        %2082 = vmatpush.bf16.msra.mxu0 0
        %2083 = vmatpush.bf16.msra.mxu0 0
        %2084 = vmatpush.bf16.msra.mxu0 0
        %2085 = vmatpush.bf16.msra.mxu0 %v2068
        %2086 = vmatpush.bf16.msra.mxu0 %v2066
        %2087 = vmatpush.bf16.msra.mxu0 %v2064
        %2088 = vmatpush.bf16.msra.mxu0 %v2062
        %2089 = vmatmul.bf16.gmra.mxu0 %v2079
        %v2090 = vpop.f32.mrf.mxu0
        %v2091 = vadd.f32 0.0, %v2090
        %v2092 = vpop.f32.mrf.mxu0
        %v2093 = vadd.f32 0.0, %v2092
        %2094 = vdwg.mxu0
        %2095 = vmatpush.bf16.msra.mxu0 0
        %2096 = vmatpush.bf16.msra.mxu0 0
        %2097 = vmatpush.bf16.msra.mxu0 0
        %2098 = vmatpush.bf16.msra.mxu0 0
        %2099 = vmatpush.bf16.msra.mxu0 %v2069
        %2100 = vmatpush.bf16.msra.mxu0 %v2067
        %2101 = vmatpush.bf16.msra.mxu0 %v2065
        %2102 = vmatpush.bf16.msra.mxu0 %v2063
        %2103 = vmatmul.bf16.gmra.mxu0 %v2079
        %v2104 = vpop.f32.mrf.mxu0
        %v2105 = vadd.f32 0.0, %v2104
        %v2106 = vpop.f32.mrf.mxu0
        %v2107 = vadd.f32 0.0, %v2106
        %2108 = vdwg.mxu0
        %v2109 = vmul.f32 %v2091, 0.5
        %v2110 = vmul.f32 %v2105, 0.5
        %v2111 = vmul.f32 %v2093, 0.5
        %v2112 = vmul.f32 %v2107, 0.5
        %v2113 = vmul.f32 %v2091, 0.044715
        %v2114 = vmul.f32 %v2105, 0.044715
        %v2115 = vmul.f32 %v2093, 0.044715
        %v2116 = vmul.f32 %v2107, 0.044715
        %v2117 = vmul.f32 %v2113, %v2091
        %v2118 = vmul.f32 %v2114, %v2105
        %v2119 = vmul.f32 %v2115, %v2093
        %v2120 = vmul.f32 %v2116, %v2107
        %v2121 = vmul.f32 %v2117, %v2091
        %v2122 = vmul.f32 %v2118, %v2105
        %v2123 = vmul.f32 %v2119, %v2093
        %v2124 = vmul.f32 %v2120, %v2107
        %v2125 = vadd.f32 %v2091, %v2121
        %v2126 = vadd.f32 %v2105, %v2122
        %v2127 = vadd.f32 %v2093, %v2123
        %v2128 = vadd.f32 %v2107, %v2124
        %v2129 = vmul.f32 %v2125, 0.7978846
        %v2130 = vmul.f32 %v2126, 0.7978846
        %v2131 = vmul.f32 %v2127, 0.7978846
        %v2132 = vmul.f32 %v2128, 0.7978846
        %v2133 = vtanh.pop %v2129
        %v2134 = vtanh.pop %v2130
        %v2135 = vtanh.pop %v2131
        %v2136 = vtanh.pop %v2132
        %v2137 = vadd.f32 %v2133, 1.0
        %v2138 = vadd.f32 %v2134, 1.0
        %v2139 = vadd.f32 %v2135, 1.0
        %v2140 = vadd.f32 %v2136, 1.0
        %v2141 = vmul.f32 %v2109, %v2137
        %v2142 = vmul.f32 %v2110, %v2138
        %v2143 = vmul.f32 %v2111, %v2139
        %v2144 = vmul.f32 %v2112, %v2140
        %v2145 = vpack.c.bf16 %v2143, %v2141
        %v2146 = vpack.c.bf16 %v2144, %v2142
        %v2147 = vld [vmem:[%s609] sm:$0xf]
        %v2148 = vld [vmem:[%s609 + $0x4] sm:$0xf]
        %v2149 = vld [vmem:[%s609 + $0x8] sm:$0xf]
        %v2150 = vld [vmem:[%s609 + $0xc] sm:$0xf]
        %v2151 = vld [vmem:[%s609 + $0x10] sm:$0xf]
        %v2152 = vld [vmem:[%s609 + $0x14] sm:$0xf]
        %v2153 = vld [vmem:[%s609 + $0x18] sm:$0xf]
        %v2154 = vld [vmem:[%s609 + $0x1c] sm:$0xf]
        %v2155 = vld [vmem:[%s609 + $0x20] sm:$0xf]
        %v2156 = vld [vmem:[%s609 + $0x24] sm:$0xf]
        %v2157 = vld [vmem:[%s609 + $0x28] sm:$0xf]
        %v2158 = vld [vmem:[%s609 + $0x2c] sm:$0xf]
        %v2159 = vld [vmem:[%s609 + $0x30] sm:$0xf]
        %v2160 = vld [vmem:[%s609 + $0x34] sm:$0xf]
        %v2161 = vld [vmem:[%s609 + $0x38] sm:$0xf]
        %v2162 = vld [vmem:[%s609 + $0x3c] sm:$0xf]
        %v2163 = vld [vmem:[%s609 + $0x40] sm:$0xf]
        %v2164 = vld [vmem:[%s609 + $0x44] sm:$0xf]
        %v2165 = vld [vmem:[%s609 + $0x48] sm:$0xf]
        %v2166 = vld [vmem:[%s609 + $0x4c] sm:$0xf]
        %v2167 = vld [vmem:[%s609 + $0x50] sm:$0xf]
        %v2168 = vld [vmem:[%s609 + $0x54] sm:$0xf]
        %v2169 = vld [vmem:[%s609 + $0x58] sm:$0xf]
        %v2170 = vld [vmem:[%s609 + $0x5c] sm:$0xf]
        %v2171 = vld [vmem:[%s609 + $0x60] sm:$0xf]
        %v2172 = vld [vmem:[%s609 + $0x64] sm:$0xf]
        %v2173 = vld [vmem:[%s609 + $0x68] sm:$0xf]
        %v2174 = vld [vmem:[%s609 + $0x6c] sm:$0xf]
        %v2175 = vld [vmem:[%s609 + $0x70] sm:$0xf]
        %v2176 = vld [vmem:[%s609 + $0x74] sm:$0xf]
        %v2177 = vld [vmem:[%s609 + $0x78] sm:$0xf]
        %v2178 = vld [vmem:[%s609 + $0x7c] sm:$0xf]
        %v2211 = vunpack.c.l.b16 %v2147
        %v2212 = vunpack.c.l.b16 %v2148
        %v2213 = vunpack.c.l.b16 %v2149
        %v2214 = vunpack.c.l.b16 %v2150
        %v2215 = vunpack.c.l.b16 %v2151
        %v2216 = vunpack.c.l.b16 %v2152
        %v2217 = vunpack.c.l.b16 %v2153
        %v2218 = vunpack.c.l.b16 %v2154
        %v2219 = vunpack.c.l.b16 %v2155
        %v2220 = vunpack.c.l.b16 %v2156
        %v2221 = vunpack.c.l.b16 %v2157
        %v2222 = vunpack.c.l.b16 %v2158
        %v2223 = vunpack.c.l.b16 %v2159
        %v2224 = vunpack.c.l.b16 %v2160
        %v2225 = vunpack.c.l.b16 %v2161
        %v2226 = vunpack.c.l.b16 %v2162
        %v2227 = vunpack.c.l.b16 %v2163
        %v2228 = vunpack.c.l.b16 %v2164
        %v2229 = vunpack.c.l.b16 %v2165
        %v2230 = vunpack.c.l.b16 %v2166
        %v2231 = vunpack.c.l.b16 %v2167
        %v2232 = vunpack.c.l.b16 %v2168
        %v2233 = vunpack.c.l.b16 %v2169
        %v2234 = vunpack.c.l.b16 %v2170
        %v2235 = vunpack.c.l.b16 %v2171
        %v2236 = vunpack.c.l.b16 %v2172
        %v2237 = vunpack.c.l.b16 %v2173
        %v2238 = vunpack.c.l.b16 %v2174
        %v2239 = vunpack.c.l.b16 %v2175
        %v2240 = vunpack.c.l.b16 %v2176
        %v2241 = vunpack.c.l.b16 %v2177
        %v2242 = vunpack.c.l.b16 %v2178
        %v2243 = vpack.c.b16 %v2212, %v2211
        %v2244 = vpack.c.b16 %v2214, %v2213
        %v2245 = vpack.c.b16 %v2216, %v2215
        %v2246 = vpack.c.b16 %v2218, %v2217
        %v2247 = vpack.c.b16 %v2220, %v2219
        %v2248 = vpack.c.b16 %v2222, %v2221
        %v2249 = vpack.c.b16 %v2224, %v2223
        %v2250 = vpack.c.b16 %v2226, %v2225
        %v2251 = vpack.c.b16 %v2228, %v2227
        %v2252 = vpack.c.b16 %v2230, %v2229
        %v2253 = vpack.c.b16 %v2232, %v2231
        %v2254 = vpack.c.b16 %v2234, %v2233
        %v2255 = vpack.c.b16 %v2236, %v2235
        %v2256 = vpack.c.b16 %v2238, %v2237
        %v2257 = vpack.c.b16 %v2240, %v2239
        %v2258 = vpack.c.b16 %v2242, %v2241
        %2275 = vmatpush.bf16.msra.mxu0 %v2250
        %2276 = vmatpush.bf16.msra.mxu0 %v2249
        %2277 = vmatpush.bf16.msra.mxu0 %v2248
        %2278 = vmatpush.bf16.msra.mxu0 %v2247
        %2279 = vmatpush.bf16.msra.mxu0 %v2246
        %2280 = vmatpush.bf16.msra.mxu0 %v2245
        %2281 = vmatpush.bf16.msra.mxu0 %v2244
        %2282 = vmatpush.bf16.msra.mxu0 %v2243
        %2283 = vmatmul.bf16.gmra.mxu0 %v2145
        %v2284 = vpop.f32.mrf.mxu0
        %v2285 = vadd.f32 0.0, %v2284
        %v2286 = vpop.f32.mrf.mxu0
        %v2287 = vadd.f32 0.0, %v2286
        %2288 = vdwg.mxu0
        %2289 = vmatpush.bf16.msra.mxu0 %v2258
        %2290 = vmatpush.bf16.msra.mxu0 %v2257
        %2291 = vmatpush.bf16.msra.mxu0 %v2256
        %2292 = vmatpush.bf16.msra.mxu0 %v2255
        %2293 = vmatpush.bf16.msra.mxu0 %v2254
        %2294 = vmatpush.bf16.msra.mxu0 %v2253
        %2295 = vmatpush.bf16.msra.mxu0 %v2252
        %2296 = vmatpush.bf16.msra.mxu0 %v2251
        %2297 = vmatmul.bf16.gmra.mxu0 %v2146
        %v2298 = vpop.f32.mrf.mxu0
        %v2299 = vadd.f32 %v2285, %v2298
        %v2300 = vpop.f32.mrf.mxu0
        %v2301 = vadd.f32 %v2287, %v2300
        %2302 = vdwg.mxu0
        %v2303 = vadd.f32 %v1971, %v2299
        %v2304 = vadd.f32 %v1972, %v2301
        %2305 = vst.msk [vmem:[#allocation2] sm:$0xff] %vm624, %v2303
        %2306 = vst.msk [vmem:[#allocation2 + $0x8] sm:$0xff] %vm624, %v2304
        %p2307 = scmp.eq.s32.totalorder %s26, 3
        // Predicated region
        $region81: #{tpu_custom_call.1} parent=75 // pred_check
          %p2308 = pneg %p2307
        $region82: #{tpu_custom_call.1} parent=75 // pred_check_branch
          %2310 = sbr.rel (%p2308) target = $region84
        $region83: #{tpu_custom_call.1} parent=75 // pred_region
          %v2311 = vld [vmem:[%s11] sm:$0x1]
          %v2312 = vld [vmem:[%s12] sm:$0x1]
          %v2313 = vsel %vm624, %v2303, 0.0
          %2314 = vadd.xlane.f32.xlu0 %v2313
          %v2315 = vpop.xlane.xlu0 %2314
          %v2316 = vsel %vm624, %v2304, 0.0
          %2317 = vadd.xlane.f32.xlu0 %v2316
          %v2318 = vpop.xlane.xlu0 %2317
          %v2319 = vmul.f32 %v2315, %v637
          %v2320 = vmul.f32 %v2318, %v637
          %v2321 = vsub.f32 %v2303, %v2319
          %v2322 = vsub.f32 %v2304, %v2320
          %v2323 = vmul.f32 %v2321, %v2321
          %v2324 = vmul.f32 %v2322, %v2322
          %v2325 = vsel %vm624, %v2323, 0.0
          %2326 = vadd.xlane.f32.xlu0 %v2325
          %v2327 = vpop.xlane.xlu0 %2326
          %v2328 = vsel %vm624, %v2324, 0.0
          %2329 = vadd.xlane.f32.xlu0 %v2328
          %v2330 = vpop.xlane.xlu0 %2329
          %v2331 = vmul.f32 %v2327, %v637
          %v2332 = vmul.f32 %v2330, %v637
          %v2333 = vadd.f32 %v2331, 1e-05
          %v2334 = vadd.f32 %v2332, 1e-05
          %v2335 = vrsqrt.pop %v2333
          %v2336 = vmul.f32 %v2335, %v2333
          %v2337 = vmul.f32 %v2336, %v2335
          %v2338 = vmul.f32 0.5, %v2337
          %v2339 = vsub.f32 1.5, %v2338
          %v2340 = vmul.f32 %v2335, %v2339
          %vm2341 = vweird.f32 %v2333
          %vm2342 = vweird.f32 %v2335
          %vm2343 = vmor %vm2341, %vm2342
          %v2344 = vsel %vm2343, %v2335, %v2340
          %v2345 = vrsqrt.pop %v2334
          %v2346 = vmul.f32 %v2345, %v2334
          %v2347 = vmul.f32 %v2346, %v2345
          %v2348 = vmul.f32 0.5, %v2347
          %v2349 = vsub.f32 1.5, %v2348
          %v2350 = vmul.f32 %v2345, %v2349
          %vm2351 = vweird.f32 %v2334
          %vm2352 = vweird.f32 %v2345
          %vm2353 = vmor %vm2351, %vm2352
          %v2354 = vsel %vm2353, %v2345, %v2350
          %v2355 = vmul.f32 %v2321, %v2344
          %v2356 = vmul.f32 %v2322, %v2354
          %v2358 = vperm.slane %v2311, 0
          %v2360 = vmul.f32 %v2355, %v2358
          %v2361 = vmul.f32 %v2356, %v2358
          %v2363 = vperm.slane %v2312, 0
          %v2365 = vadd.f32 %v2360, %v2363
          %v2366 = vadd.f32 %v2361, %v2363
          %v2367 = vpack.c.bf16 %v2366, %v2365
          %v2368 = vld [vmem:[%s13] sm:$0xf]
          %v2369 = vld [vmem:[%s13 + $0x4] sm:$0xf]
          %v2370 = vld [vmem:[%s13 + $0x8] sm:$0xf]
          %v2371 = vld [vmem:[%s13 + $0xc] sm:$0xf]
          %v2372 = vld [vmem:[%s13 + $0x10] sm:$0xf]
          %v2373 = vld [vmem:[%s13 + $0x14] sm:$0xf]
          %v2374 = vld [vmem:[%s13 + $0x18] sm:$0xf]
          %v2375 = vld [vmem:[%s13 + $0x1c] sm:$0xf]
          %v2384 = vunpack.c.l.b16 %v2368
          %v2385 = vunpack.c.l.b16 %v2369
          %v2386 = vunpack.c.l.b16 %v2370
          %v2387 = vunpack.c.l.b16 %v2371
          %v2388 = vunpack.c.l.b16 %v2372
          %v2389 = vunpack.c.l.b16 %v2373
          %v2390 = vunpack.c.l.b16 %v2374
          %v2391 = vunpack.c.l.b16 %v2375
          %v2392 = vpack.c.b16 %v2385, %v2384
          %v2393 = vpack.c.b16 %v2387, %v2386
          %v2394 = vpack.c.b16 %v2389, %v2388
          %v2395 = vpack.c.b16 %v2391, %v2390
          %v2401 = vsel %vm624, %v2367, 0
          %2403 = vmatpush.bf16.msra.mxu0 0
          %2404 = vmatpush.bf16.msra.mxu0 0
          %2405 = vmatpush.bf16.msra.mxu0 0
          %2406 = vmatpush.bf16.msra.mxu0 0
          %2407 = vmatpush.bf16.msra.mxu0 %v2395
          %2408 = vmatpush.bf16.msra.mxu0 %v2394
          %2409 = vmatpush.bf16.msra.mxu0 %v2393
          %2410 = vmatpush.bf16.msra.mxu0 %v2392
          %2411 = vmatmul.bf16.gmra.mxu0 %v2401
          %v2412 = vpop.f32.mrf.mxu0
          %v2413 = vadd.f32 0.0, %v2412
          %v2414 = vpop.f32.mrf.mxu0
          %v2415 = vadd.f32 0.0, %v2414
          %2416 = vdwg.mxu0
          %2417 = vst [vmem:[#allocation3] sm:$0xff] %v2413
          %2418 = vst [vmem:[#allocation3 + $0x8] sm:$0xff] %v2415
        $region84: #{tpu_custom_call.1} parent=75 // pred_fallthru
          _
        // Predicated region
        $region85: #{tpu_custom_call.1} parent=75 // pred_check
          %p2419 = pneg %p383
        $region86: #{tpu_custom_call.1} parent=75 // pred_check_branch
          %2421 = sbr.rel (%p2419) target = $region88
        $region87: #{tpu_custom_call.1} parent=75 // pred_region
          %2423 = vsyncadd [#allocation4], 0
          %s2424 = sshll.u32 [#allocation3], 4
          %s2425 = int_to_ptr.vmem [resolvable:$true] %s2424
          %s2426 = sshll.u32 %s14, 4
          %s2427 = int_to_ptr.hbm [resolvable:$true] %s2426
          %2432 = dma.vmem_to_hbm [thread:$0]  %s2425, 256, %s2427, [#allocation4], 128, 128, 8
        $region88: #{tpu_custom_call.1} parent=75 // pred_fallthru
          _
        // Predicated region
        $region89: #{tpu_custom_call.1} parent=75 // pred_check
          %p2433 = pneg %p383
        $region90: #{tpu_custom_call.1} parent=75 // pred_check_branch
          %2435 = sbr.rel (%p2433) target = $region92
        $region91: #{tpu_custom_call.1} parent=75 // pred_region
          %2437 = dma.done [#allocation4], 256
        $region92: #{tpu_custom_call.1} parent=75 // pred_fallthru
          _
      $region76: #{tpu_custom_call.1} parent=5 // pred_fallthru
        _
      %p2438 = scmp.le.s32.totalorder 2, %s21
      // Predicated region
      $region93: #{tpu_custom_call.1} parent=5 // pred_check
        %p2439 = pneg %p2438
      $region94: #{tpu_custom_call.1} parent=5 // pred_check_branch
        %2441 = sbr.rel (%p2439) target = $region96
      $region95: #{tpu_custom_call.1} parent=5 // pred_region
        %s2442 = ssub.s32 %s21, 2
      $region96: #{tpu_custom_call.1} parent=5 // pred_fallthru
        _
    $region6: #{tpu_custom_call.1} parent=1 // loop_footer
      %s25 = sadd.s32 1, %s21
    $region7: #{tpu_custom_call.1} parent=1 // loop_footer_branch
      %20 = sbr.rel target = $region3
    $region8: #{tpu_custom_call.1} parent=1 // loop_exit
      _
    %2443 = vsyncpa [#allocation4], 1
    %s2444 = scalar_lea.sflag [#allocation4], 1
    %2445 = vsyncpa %s2444, 1

</llo_original>
